<compile_context>
chip_gen: v7x
topology: tpu7x:2x2x1
jax: 0.10.0
libtpu: 0.0.40
codegen_flags: <defaults>
</compile_context>

<pallas_src>
import functools
import math

import jax
import jax.numpy as jnp
from jax.experimental import pallas as pl
from jax.experimental.pallas import tpu as pltpu

SQRT_HALF = math.sqrt(0.5)


def _round_up(x, m):
    return ((x + m - 1) // m) * m


def conv_decoder_kernel(embx_ref, enc_out_ref, enc_attn_t_ref,
                        fc1_w, fc1_b, conv_w, conv_b,
                        fce_w, fce_b, fec_w, fec_b,
                        fc2_w, fc2_b, fc3_w, fc3_b,
                        out_ref, pad_buf, *, num_layers, attn_scale, s_valid):
    Bb, T, E = embx_ref.shape
    H = fc1_w.shape[1]
    Vp = fc3_w.shape[1]
    Sp = enc_out_ref.shape[1]
    BT = Bb * T
    f32, bf16 = jnp.float32, jnp.bfloat16

    # ---- fc1 (bf16 MXU, f32 accumulation) ----
    x = embx_ref[...].reshape(BT, E)                                  # bf16 [BT, E]
    h = jnp.dot(x, fc1_w[...], preferred_element_type=f32) + fc1_b[...]
    residual = h                                                      # f32 [BT, H]

    # ---- loop-invariant values hoisted (JAX does not CSE broadcast_in_dim) ----
    conv_w_v = conv_w[...]                                            # bf16 [5H, 2H]
    conv_b_bc = jnp.broadcast_to(conv_b[...], (BT, 2 * H))            # f32
    fce_w_v, fec_w_v = fce_w[...], fec_w[...]                         # bf16
    fce_b_bc = jnp.broadcast_to(fce_b[...], (BT, E))                  # f32
    fec_b_bc = jnp.broadcast_to(fec_b[...], (BT, H))                  # f32
    enc_out = enc_out_ref[...]                                        # bf16 [Bb, Sp, E]
    enc_attn_t = enc_attn_t_ref[...]                                  # bf16 [Bb, E, Sp]
    if s_valid < Sp:
        # Mask the zero-padded encoder (key) positions before the softmax max.
        key_pos = jax.lax.broadcasted_iota(jnp.int32, (1, Sp), 1)
        key_mask = jnp.where(key_pos < s_valid, 0.0, -1e30).astype(f32)
    else:
        key_mask = None

    # Causal zero rows of the conv scratch, written once per grid step.
    pad_buf[:, 0:8, :] = jnp.zeros((Bb, 8, H), bf16)

    def layer_body(_, layer):
        # Causal width-5 conv + GLU: write the layer once into the persistent
        # scratch, accumulate 5 per-tap [BT,H] x [H,2H] bf16 dots in f32
        # (value | gate fused in the weight columns).
        pad_buf[:, 8:8 + T, :] = layer.reshape(Bb, T, H).astype(bf16)
        ag = conv_b_bc
        for k in range(5):
            win = pad_buf[:, 4 + k:4 + k + T, :].reshape(BT, H)
            ag = ag + jnp.dot(win, conv_w_v[k * H:(k + 1) * H, :],
                              preferred_element_type=f32)
        glu = ag[:, :H] * jax.nn.sigmoid(ag[:, H:])                   # f32 [BT, H]

        # fc_conv_embedding
        post = jnp.dot(glu.astype(bf16), fce_w_v,
                       preferred_element_type=f32) + fce_b_bc         # f32 [BT, E]
        post3 = post.astype(bf16).reshape(Bb, T, E)

        # attention: bmm -> exact softmax (f32) -> bmm -> scale
        logits = jnp.einsum('bte,bes->bts', post3, enc_attn_t,
                            preferred_element_type=f32)               # f32 [Bb, T, Sp]
        if key_mask is not None:
            logits = logits + key_mask
        m = jnp.max(logits, axis=-1, keepdims=True)
        e = jnp.exp(logits - m)
        attn = e / jnp.sum(e, axis=-1, keepdims=True)                 # exact divide
        ctx = jnp.einsum('bts,bse->bte', attn.astype(bf16), enc_out,
                         preferred_element_type=f32) * attn_scale     # f32 [Bb, T, E]

        # fc_embedding_conv + in-loop residual
        new_layer = (jnp.dot(ctx.reshape(BT, E).astype(bf16), fec_w_v,
                             preferred_element_type=f32)
                     + fec_b_bc + glu) * SQRT_HALF                    # f32 [BT, H]
        return new_layer

    layer = jax.lax.fori_loop(0, num_layers, layer_body, residual)
    layer = (layer + residual) * SQRT_HALF

    # fc2 -> fc3 (vocab padded, lane-dense) -> log_softmax (all f32 math)
    y2 = jnp.dot(layer.astype(bf16), fc2_w[...], preferred_element_type=f32) + fc2_b[...]
    y3 = jnp.dot(y2.astype(bf16), fc3_w[...], preferred_element_type=f32) + fc3_b[...]
    m3 = jnp.max(y3, axis=-1, keepdims=True)
    z = y3 - m3
    lse = jnp.log(jnp.sum(jnp.exp(z), axis=-1, keepdims=True))
    out_ref[...] = (z - lse).reshape(Bb, T, Vp)


def _vmem_plan(Tp, Sp, E, H, Vp):
    """Rough per-grid-step VMEM bytes: (fixed weight bytes, per-batch-row bytes)."""
    wt_bf16 = E * H + 5 * H * 2 * H + H * E + E * H + H * E + E * Vp
    bias_f32 = H + 2 * H + E + H + E + Vp
    fixed = 2 * (2 * wt_bf16 + 4 * bias_f32)             # double-buffered resident weights
    per_b = (2 * 2 * (Tp * E + Sp * E + E * Sp)          # double-buffered bf16 input blocks
             + 2 * 4 * Tp * Vp                           # double-buffered f32 output block
             + 2 * (Tp + 8) * H                          # conv scratch (bf16)
             + 4 * Tp * (10 * H + 6 * E + 4 * Sp + 4 * Vp))   # live f32 intermediates
    return fixed, per_b


def _pick_batch_block(B, Tp, fixed, per_b, budget_bytes=24 << 20, min_rows=256):
    """Largest divisor of B fitting the VMEM budget; prefer >=2 grid steps (v7x
    megacore) once each step still fills the MXU with >= min_rows rows."""
    bb = 1
    for cand in range(B, 0, -1):
        if B % cand == 0 and fixed + cand * per_b <= budget_bytes:
            bb = cand
            break
    if bb == B and B > 1:
        for cand in range(B // 2, 0, -1):
            if B % cand == 0 and cand * Tp >= min_rows:
                bb = cand
                break
    return bb


def conv_decoder_forward(token_ids, encoder_outputs, encoder_attention, params, num_layers):
    B, T = token_ids.shape
    E = params["emb"].shape[1]
    H = params["fc1_w"].shape[1]
    V = params["fc3_w"].shape[1]
    S = encoder_outputs.shape[2]

    Tp = _round_up(T, 8)        # sublane-aligned time axis
    Sp = _round_up(S, 128)      # lane-dense encoder (key) axis
    Vp = _round_up(V, 128)      # lane-dense vocab axis
    f32, bf16 = jnp.float32, jnp.bfloat16

    # --- JAX glue: embedding + positional embedding (dropout p=0 -> identity) ---
    emb = params["emb"][token_ids] + params["pos"][jnp.arange(T)][None, :, :]    # f32
    emb = jnp.zeros((B, Tp, E), bf16).at[:, :T, :].set(emb.astype(bf16))
    enc_out = jnp.zeros((B, Sp, E), bf16).at[:, :S, :].set(
        encoder_outputs[:, 0].astype(bf16))
    enc_attn_t = jnp.zeros((B, E, Sp), bf16).at[:, :, :S].set(
        jnp.swapaxes(encoder_attention[:, 0], 1, 2).astype(bf16))

    # Weights in bf16 for the MXU; biases stay f32 (f32 accumulation & pad bias).
    wb = lambda name: params[name].astype(bf16)
    fc3_w_p = jnp.zeros((E, Vp), bf16).at[:, :V].set(params["fc3_w"].astype(bf16))
    fc3_b_p = jnp.full((1, Vp), -1e30, f32).at[:, :V].set(params["fc3_b"])

    attn_scale = float(E * math.sqrt(2.0 / E))

    fixed, per_b = _vmem_plan(Tp, Sp, E, H, Vp)
    bb = _pick_batch_block(B, Tp, fixed, per_b)
    vmem_limit = int(min(64 << 20, max(32 << 20, 2 * (fixed + bb * per_b))))
    grid = (B // bb,)

    kernel = functools.partial(conv_decoder_kernel, num_layers=num_layers,
                               attn_scale=attn_scale, s_valid=S)

    def full(shape):
        # NOTE(prod): add pipeline_mode=pl.Buffered(1) here (constant index_map
        # => no re-DMA) to single-buffer the resident weights and halve their VMEM.
        return pl.BlockSpec(shape, lambda b, _n=len(shape): (0,) * _n)

    grid_spec = pltpu.PrefetchScalarGridSpec(
        num_scalar_prefetch=0,
        grid=grid,
        in_specs=[
            pl.BlockSpec((bb, Tp, E), lambda b: (b, 0, 0)),   # embedded tokens (bf16)
            pl.BlockSpec((bb, Sp, E), lambda b: (b, 0, 0)),   # encoder outputs (bf16)
            pl.BlockSpec((bb, E, Sp), lambda b: (b, 0, 0)),   # encoder attention^T (bf16)
            full((E, H)), full((1, H)),                       # fc1
            full((5 * H, 2 * H)), full((1, 2 * H)),           # conv (value|gate fused)
            full((H, E)), full((1, E)),                       # fc_conv_embedding
            full((E, H)), full((1, H)),                       # fc_embedding_conv
            full((H, E)), full((1, E)),                       # fc2
            full((E, Vp)), full((1, Vp)),                     # fc3 (vocab-padded)
        ],
        out_specs=pl.BlockSpec((bb, Tp, Vp), lambda b: (b, 0, 0)),
        scratch_shapes=[pltpu.VMEM((bb, Tp + 8, H), bf16)],   # causal-conv pad buffer
    )

    # Advisory cost estimate for XLA's scheduler.
    flops = 2 * B * Tp * (E * H
                          + num_layers * (5 * H * 2 * H + H * E + 2 * E * Sp + E * H)
                          + H * E + E * Vp)
    transcendentals = B * Tp * (num_layers * (H + Sp) + Vp)
    bytes_accessed = (2 * B * (Tp * E + 2 * Sp * E) + 4 * B * Tp * Vp
                      + 2 * (3 * E * H + 10 * H * H + H * E + E * Vp)
                      + 4 * (3 * H + 2 * E + 2 * H + Vp))
    cost = pl.CostEstimate(flops=int(flops), transcendentals=int(transcendentals),
                           bytes_accessed=int(bytes_accessed))

    # TODO(synk): for production-size vocab, tile fc3 + log_softmax over Vp
    # (second "arbitrary" grid axis with online logsumexp) so the kernel fits
    # v7x's 64 MiB VMEM; unnecessary at Vp=128.
    out = pl.pallas_call(
        kernel,
        out_shape=jax.ShapeDtypeStruct((B, Tp, Vp), f32),
        grid_spec=grid_spec,
        compiler_params=pltpu.CompilerParams(
            dimension_semantics=("parallel",),
            vmem_limit_bytes=vmem_limit),
        cost_estimate=cost,
    )(emb, enc_out, enc_attn_t,
      wb("fc1_w"), params["fc1_b"],
      wb("conv_w_fused"), params["conv_b_fused"],
      wb("fce_w"), params["fce_b"], wb("fec_w"), params["fec_b"],
      wb("fc2_w"), params["fc2_b"], fc3_w_p, fc3_b_p)

    return out[:, None, :T, :V]    # match PyTorch shape [B, 1, T, V]


def ref_forward(token_ids, encoder_outputs, encoder_attention, params, num_layers,
                matmul_dtype=jnp.float32):
    """Pure-JAX reference mirroring the PyTorch forward (dropout p=0).

    matmul_dtype=bfloat16 reproduces the kernel's precision policy (bf16 matmul
    operands, f32 accumulation, f32 softmax/log_softmax) for a tight check.
    """
    B, T = token_ids.shape
    E = params["emb"].shape[1]
    md = matmul_dtype

    def mm(a, b):
        return jnp.dot(a.astype(md), b.astype(md), preferred_element_type=jnp.float32)

    emb = params["emb"][token_ids] + params["pos"][jnp.arange(T)][None, :, :]
    h = mm(emb, params["fc1_w"]) + params["fc1_b"]
    residual, layer = h, h
    attn_scale = E * math.sqrt(2.0 / E)
    enc_out = encoder_outputs[:, 0]
    enc_attn = encoder_attention[:, 0]
    for _ in range(num_layers):
        xp = jnp.pad(layer, ((0, 0), (4, 0), (0, 0)))
        a = jnp.zeros_like(layer) + params["conv_ba"]
        g = jnp.zeros_like(layer) + params["conv_bg"]
        for k in range(5):
            xk = xp[:, k:k + T, :]
            a = a + mm(xk, params["conv_wa"][k])
            g = g + mm(xk, params["conv_wg"][k])
        glu = a * jax.nn.sigmoid(g)
        post = mm(glu, params["fce_w"]) + params["fce_b"]
        logits = jnp.einsum('bte,bse->bts', post.astype(md), enc_attn.astype(md),
                            preferred_element_type=jnp.float32)
        attn = jax.nn.softmax(logits, axis=-1)
        ctx = jnp.einsum('bts,bse->bte', attn.astype(md), enc_out.astype(md),
                         preferred_element_type=jnp.float32) * attn_scale
        layer = (mm(ctx, params["fec_w"]) + params["fec_b"] + glu) * SQRT_HALF
    layer = (layer + residual) * SQRT_HALF
    y2 = mm(layer, params["fc2_w"]) + params["fc2_b"]
    y3 = mm(y2, params["fc3_w"]) + params["fc3_b"]
    return jax.nn.log_softmax(y3, axis=-1)[:, None]


def init_params(key, vocab_size, max_length, hidden_size, embedding_size):
    ks = jax.random.split(key, 12)
    n = lambda k, shape, s=0.1: (jax.random.normal(k, shape, jnp.float32) * s)
    H, E, V = hidden_size, embedding_size, vocab_size
    # PyTorch conv weight is [2H, 1, 5, H]; per tap k, re-layout as (in=H, out=H)
    # and split into value/gate halves.
    conv_w = n(ks[2], (2 * H, 1, 5, H))
    conv_b = n(ks[3], (2 * H,))
    conv_wa = jnp.stack([conv_w[:H, 0, k, :].T for k in range(5)])   # [5, H, H]
    conv_wg = jnp.stack([conv_w[H:, 0, k, :].T for k in range(5)])   # [5, H, H]
    # Fused weight: rows k*H:(k+1)*H hold tap k, columns = [value | gate].
    conv_w_fused = jnp.concatenate(
        [jnp.concatenate([conv_wa[k], conv_wg[k]], axis=1) for k in range(5)], axis=0)
    conv_b_fused = conv_b.reshape(1, 2 * H)
    return {
        "emb": n(ks[0], (V + 3, E)),
        "pos": n(ks[1], (max_length, E)),
        "conv_wa": conv_wa, "conv_ba": conv_b[:H].reshape(1, H),
        "conv_wg": conv_wg, "conv_bg": conv_b[H:].reshape(1, H),
        "conv_w_fused": conv_w_fused, "conv_b_fused": conv_b_fused,
        "fc1_w": n(ks[4], (E, H)), "fc1_b": n(ks[5], (1, H)),
        "fce_w": n(ks[6], (H, E)), "fce_b": n(ks[7], (1, E)),
        "fec_w": n(ks[8], (E, H)), "fec_b": n(ks[9], (1, H)),
        "fc2_w": n(ks[10], (H, E)), "fc2_b": jnp.zeros((1, E), jnp.float32),
        "fc3_w": n(ks[11], (E, V)), "fc3_b": jnp.zeros((1, V), jnp.float32),
    }


if __name__ == "__main__":
    # Module hyper-params (dropout=0.0, is_training=False -> dropout is identity).
    vocab_size, max_length, hidden_size, embedding_size, num_layers = 16, 16, 32, 32, 2
    B, T, S = 2, 8, 8

    key = jax.random.PRNGKey(0)
    kp, kt, ke, ka = jax.random.split(key, 4)
    params = init_params(kp, vocab_size, max_length, hidden_size, embedding_size)

    token_ids = jax.random.randint(kt, (B, T), 0, vocab_size + 3, dtype=jnp.int32)
    encoder_outputs = jax.random.normal(ke, (B, 1, S, embedding_size), jnp.float32)
    encoder_attention = jax.random.normal(ka, (B, 1, S, embedding_size), jnp.float32)

    out = conv_decoder_forward(token_ids, encoder_outputs, encoder_attention,
                               params, num_layers)
    out = jax.block_until_ready(out)
    assert out.shape == (B, 1, T, vocab_size), out.shape

    # Primary check: reference with the SAME precision policy as the kernel
    # (bf16 matmul operands, f32 accumulation, f32 softmax/log_softmax).
    ref_matched = ref_forward(token_ids, encoder_outputs, encoder_attention, params,
                              num_layers, matmul_dtype=jnp.bfloat16)
    err_matched = float(jnp.max(jnp.abs(out - ref_matched)))
    assert err_matched < 5e-3, ("matched-precision mismatch", err_matched)

    # Loose sanity check vs. the full-f32 PyTorch-faithful reference: bounds the
    # total bf16 drift and catches any gross structural error.
    ref_f32 = ref_forward(token_ids, encoder_outputs, encoder_attention, params,
                          num_layers, matmul_dtype=jnp.float32)
    err_f32 = float(jnp.max(jnp.abs(out - ref_f32)))
    assert err_f32 < 0.5, ("f32-reference sanity mismatch", err_f32)

    print("KERNEL_OK")
</pallas_src>

<mosaic_0001>
module attributes {stable_mosaic.version = 11 : i64} {
  func.func @conv_decoder_kernel(%arg0: i32, %arg1: memref<2x8x32xbf16, #tpu.memory_space<vmem>>, %arg2: memref<2x128x32xbf16, #tpu.memory_space<vmem>>, %arg3: memref<2x32x128xbf16, #tpu.memory_space<vmem>>, %arg4: memref<32x32xbf16, #tpu.memory_space<vmem>>, %arg5: memref<1x32xf32, #tpu.memory_space<vmem>>, %arg6: memref<160x64xbf16, #tpu.memory_space<vmem>>, %arg7: memref<1x64xf32, #tpu.memory_space<vmem>>, %arg8: memref<32x32xbf16, #tpu.memory_space<vmem>>, %arg9: memref<1x32xf32, #tpu.memory_space<vmem>>, %arg10: memref<32x32xbf16, #tpu.memory_space<vmem>>, %arg11: memref<1x32xf32, #tpu.memory_space<vmem>>, %arg12: memref<32x32xbf16, #tpu.memory_space<vmem>>, %arg13: memref<1x32xf32, #tpu.memory_space<vmem>>, %arg14: memref<32x128xbf16, #tpu.memory_space<vmem>>, %arg15: memref<1x128xf32, #tpu.memory_space<vmem>>, %arg16: memref<2x8x128xf32, #tpu.memory_space<vmem>>, %arg17: memref<2x16x32xbf16, #tpu.memory_space<vmem>>) attributes {dimension_semantics = [#tpu.dimension_semantics<parallel>], iteration_bounds = array<i64: 1>, scalar_prefetch = 0 : i64, scratch_operands = 1 : i64, tpu.core_type = #tpu.core_type<tc>, window_params = [{transform_indices = @transform_0, window_bounds = array<i64: 2, 8, 32>}, {transform_indices = @transform_1, window_bounds = array<i64: 2, 128, 32>}, {transform_indices = @transform_2, window_bounds = array<i64: 2, 32, 128>}, {pipeline_mode = #tpu.pipeline_mode<synchronous>, transform_indices = @transform_3, window_bounds = array<i64: 32, 32>}, {pipeline_mode = #tpu.pipeline_mode<synchronous>, transform_indices = @transform_4, window_bounds = array<i64: 1, 32>}, {pipeline_mode = #tpu.pipeline_mode<synchronous>, transform_indices = @transform_5, window_bounds = array<i64: 160, 64>}, {pipeline_mode = #tpu.pipeline_mode<synchronous>, transform_indices = @transform_6, window_bounds = array<i64: 1, 64>}, {pipeline_mode = #tpu.pipeline_mode<synchronous>, transform_indices = @transform_7, window_bounds = array<i64: 32, 32>}, {pipeline_mode = #tpu.pipeline_mode<synchronous>, transform_indices = @transform_8, window_bounds = array<i64: 1, 32>}, {pipeline_mode = #tpu.pipeline_mode<synchronous>, transform_indices = @transform_9, window_bounds = array<i64: 32, 32>}, {pipeline_mode = #tpu.pipeline_mode<synchronous>, transform_indices = @transform_10, window_bounds = array<i64: 1, 32>}, {pipeline_mode = #tpu.pipeline_mode<synchronous>, transform_indices = @transform_11, window_bounds = array<i64: 32, 32>}, {pipeline_mode = #tpu.pipeline_mode<synchronous>, transform_indices = @transform_12, window_bounds = array<i64: 1, 32>}, {pipeline_mode = #tpu.pipeline_mode<synchronous>, transform_indices = @transform_13, window_bounds = array<i64: 32, 128>}, {pipeline_mode = #tpu.pipeline_mode<synchronous>, transform_indices = @transform_14, window_bounds = array<i64: 1, 128>}, {transform_indices = @transform_15, window_bounds = array<i64: 2, 8, 128>}]} {
    %c0 = arith.constant 0 : index
    %c0_0 = arith.constant 0 : index
    %c0_1 = arith.constant 0 : index
    %0 = vector.load %arg1[%c0, %c0_0, %c0_1] : memref<2x8x32xbf16, #tpu.memory_space<vmem>>, vector<2x8x32xbf16>
    %1 = vector.shape_cast %0 : vector<2x8x32xbf16> to vector<16x32xbf16>
    %c0_2 = arith.constant 0 : index
    %c0_3 = arith.constant 0 : index
    %2 = vector.load %arg4[%c0_2, %c0_3] : memref<32x32xbf16, #tpu.memory_space<vmem>>, vector<32x32xbf16>
    %cst = arith.constant dense<0.000000e+00> : vector<16x32xf32>
    %3 = tpu.matmul %1, %2, %cst {dimension_numbers = #tpu.dot_dimension_numbers<[1], [0], [0], [1], [0, 0, 1, 1], [], []>} : vector<16x32xbf16>, vector<32x32xbf16>, vector<16x32xf32> -> vector<16x32xf32>
    %c0_4 = arith.constant 0 : index
    %c0_5 = arith.constant 0 : index
    %4 = vector.load %arg5[%c0_4, %c0_5] : memref<1x32xf32, #tpu.memory_space<vmem>>, vector<1x32xf32>
    %5 = vector.broadcast %4 : vector<1x32xf32> to vector<16x32xf32>
    %6 = arith.addf %3, %5 : vector<16x32xf32>
    %c0_6 = arith.constant 0 : index
    %c0_7 = arith.constant 0 : index
    %7 = vector.load %arg6[%c0_6, %c0_7] : memref<160x64xbf16, #tpu.memory_space<vmem>>, vector<160x64xbf16>
    %c0_8 = arith.constant 0 : index
    %c0_9 = arith.constant 0 : index
    %8 = vector.load %arg7[%c0_8, %c0_9] : memref<1x64xf32, #tpu.memory_space<vmem>>, vector<1x64xf32>
    %9 = vector.shape_cast %8 : vector<1x64xf32> to vector<1x64xf32>
    %10 = vector.broadcast %9 : vector<1x64xf32> to vector<16x64xf32>
    %c0_10 = arith.constant 0 : index
    %c0_11 = arith.constant 0 : index
    %11 = vector.load %arg8[%c0_10, %c0_11] : memref<32x32xbf16, #tpu.memory_space<vmem>>, vector<32x32xbf16>
    %c0_12 = arith.constant 0 : index
    %c0_13 = arith.constant 0 : index
    %12 = vector.load %arg10[%c0_12, %c0_13] : memref<32x32xbf16, #tpu.memory_space<vmem>>, vector<32x32xbf16>
    %c0_14 = arith.constant 0 : index
    %c0_15 = arith.constant 0 : index
    %13 = vector.load %arg9[%c0_14, %c0_15] : memref<1x32xf32, #tpu.memory_space<vmem>>, vector<1x32xf32>
    %14 = vector.shape_cast %13 : vector<1x32xf32> to vector<1x32xf32>
    %15 = vector.broadcast %14 : vector<1x32xf32> to vector<16x32xf32>
    %c0_16 = arith.constant 0 : index
    %c0_17 = arith.constant 0 : index
    %16 = vector.load %arg11[%c0_16, %c0_17] : memref<1x32xf32, #tpu.memory_space<vmem>>, vector<1x32xf32>
    %17 = vector.shape_cast %16 : vector<1x32xf32> to vector<1x32xf32>
    %18 = vector.broadcast %17 : vector<1x32xf32> to vector<16x32xf32>
    %c0_18 = arith.constant 0 : index
    %c0_19 = arith.constant 0 : index
    %c0_20 = arith.constant 0 : index
    %19 = vector.load %arg2[%c0_18, %c0_19, %c0_20] : memref<2x128x32xbf16, #tpu.memory_space<vmem>>, vector<2x128x32xbf16>
    %c0_21 = arith.constant 0 : index
    %c0_22 = arith.constant 0 : index
    %c0_23 = arith.constant 0 : index
    %20 = vector.load %arg3[%c0_21, %c0_22, %c0_23] : memref<2x32x128xbf16, #tpu.memory_space<vmem>>, vector<2x32x128xbf16>
    %21 = tpu.iota {dimensions = array<i32: 1>} : vector<1x128xi32>
    %c8_i32 = arith.constant 8 : i32
    %22 = vector.broadcast %c8_i32 : i32 to vector<1x128xi32>
    %23 = arith.cmpi slt, %21, %22 : vector<1x128xi32>
    %cst_24 = arith.constant 0.000000e+00 : f32
    %cst_25 = arith.constant -1.000000e+30 : f32
    %24 = vector.broadcast %cst_24 : f32 to vector<1x128xf32>
    %25 = vector.broadcast %cst_25 : f32 to vector<1x128xf32>
    %26 = arith.select %23, %24, %25 : vector<1x128xi1>, vector<1x128xf32>
    %cst_26 = arith.constant 0.000000e+00 : bf16
    %27 = vector.broadcast %cst_26 : bf16 to vector<2x8x32xbf16>
    %c0_27 = arith.constant 0 : index
    %c0_28 = arith.constant 0 : index
    %c0_29 = arith.constant 0 : index
    %28 = vector.load %arg17[%c0_27, %c0_28, %c0_29] : memref<2x16x32xbf16, #tpu.memory_space<vmem>>, vector<2x8x32xbf16>
    tpu.vector_store %arg17[%c0_27, %c0_28, %c0_29], %27 {strides = array<i32>} : memref<2x16x32xbf16, #tpu.memory_space<vmem>>, vector<2x8x32xbf16>,
    %c0_i32 = arith.constant 0 : i32
    %c2_i32 = arith.constant 2 : i32
    %29 = arith.addi %c0_i32, %c2_i32 : i32
    %c1_i32 = arith.constant 1 : i32
    %30 = scf.for %arg18 = %c0_i32 to %29 step %c1_i32 iter_args(%arg19 = %6) -> (vector<16x32xf32>)  : i32 {
      %58 = vector.shape_cast %arg19 : vector<16x32xf32> to vector<2x8x32xf32>
      %59 = arith.truncf %58 : vector<2x8x32xf32> to vector<2x8x32xbf16>
      %c0_46 = arith.constant 0 : index
      %c8 = arith.constant 8 : index
      %c0_47 = arith.constant 0 : index
      %60 = vector.load %arg17[%c0_46, %c8, %c0_47] : memref<2x16x32xbf16, #tpu.memory_space<vmem>>, vector<2x8x32xbf16>
      tpu.vector_store %arg17[%c0_46, %c8, %c0_47], %59 {strides = array<i32>} : memref<2x16x32xbf16, #tpu.memory_space<vmem>>, vector<2x8x32xbf16>,
      %c0_48 = arith.constant 0 : index
      %c4 = arith.constant 4 : index
      %c0_49 = arith.constant 0 : index
      %61 = vector.load %arg17[%c0_48, %c4, %c0_49] : memref<2x16x32xbf16, #tpu.memory_space<vmem>>, vector<2x8x32xbf16>
      %62 = vector.shape_cast %61 : vector<2x8x32xbf16> to vector<16x32xbf16>
      %63 = vector.extract_strided_slice %7 {offsets = [0, 0], sizes = [32, 64], strides = [1, 1]} : vector<160x64xbf16> to vector<32x64xbf16>
      %cst_50 = arith.constant dense<0.000000e+00> : vector<16x64xf32>
      %64 = tpu.matmul %62, %63, %cst_50 {dimension_numbers = #tpu.dot_dimension_numbers<[1], [0], [0], [1], [0, 0, 1, 1], [], []>} : vector<16x32xbf16>, vector<32x64xbf16>, vector<16x64xf32> -> vector<16x64xf32>
      %65 = arith.addf %10, %64 : vector<16x64xf32>
      %c0_51 = arith.constant 0 : index
      %c5 = arith.constant 5 : index
      %c0_52 = arith.constant 0 : index
      %66 = vector.load %arg17[%c0_51, %c5, %c0_52] : memref<2x16x32xbf16, #tpu.memory_space<vmem>>, vector<2x8x32xbf16>
      %67 = vector.shape_cast %66 : vector<2x8x32xbf16> to vector<16x32xbf16>
      %68 = vector.extract_strided_slice %7 {offsets = [32, 0], sizes = [32, 64], strides = [1, 1]} : vector<160x64xbf16> to vector<32x64xbf16>
      %cst_53 = arith.constant dense<0.000000e+00> : vector<16x64xf32>
      %69 = tpu.matmul %67, %68, %cst_53 {dimension_numbers = #tpu.dot_dimension_numbers<[1], [0], [0], [1], [0, 0, 1, 1], [], []>} : vector<16x32xbf16>, vector<32x64xbf16>, vector<16x64xf32> -> vector<16x64xf32>
      %70 = arith.addf %65, %69 : vector<16x64xf32>
      %c0_54 = arith.constant 0 : index
      %c6 = arith.constant 6 : index
      %c0_55 = arith.constant 0 : index
      %71 = vector.load %arg17[%c0_54, %c6, %c0_55] : memref<2x16x32xbf16, #tpu.memory_space<vmem>>, vector<2x8x32xbf16>
      %72 = vector.shape_cast %71 : vector<2x8x32xbf16> to vector<16x32xbf16>
      %73 = vector.extract_strided_slice %7 {offsets = [64, 0], sizes = [32, 64], strides = [1, 1]} : vector<160x64xbf16> to vector<32x64xbf16>
      %cst_56 = arith.constant dense<0.000000e+00> : vector<16x64xf32>
      %74 = tpu.matmul %72, %73, %cst_56 {dimension_numbers = #tpu.dot_dimension_numbers<[1], [0], [0], [1], [0, 0, 1, 1], [], []>} : vector<16x32xbf16>, vector<32x64xbf16>, vector<16x64xf32> -> vector<16x64xf32>
      %75 = arith.addf %70, %74 : vector<16x64xf32>
      %c0_57 = arith.constant 0 : index
      %c7 = arith.constant 7 : index
      %c0_58 = arith.constant 0 : index
      %76 = vector.load %arg17[%c0_57, %c7, %c0_58] : memref<2x16x32xbf16, #tpu.memory_space<vmem>>, vector<2x8x32xbf16>
      %77 = vector.shape_cast %76 : vector<2x8x32xbf16> to vector<16x32xbf16>
      %78 = vector.extract_strided_slice %7 {offsets = [96, 0], sizes = [32, 64], strides = [1, 1]} : vector<160x64xbf16> to vector<32x64xbf16>
      %cst_59 = arith.constant dense<0.000000e+00> : vector<16x64xf32>
      %79 = tpu.matmul %77, %78, %cst_59 {dimension_numbers = #tpu.dot_dimension_numbers<[1], [0], [0], [1], [0, 0, 1, 1], [], []>} : vector<16x32xbf16>, vector<32x64xbf16>, vector<16x64xf32> -> vector<16x64xf32>
      %80 = arith.addf %75, %79 : vector<16x64xf32>
      %c0_60 = arith.constant 0 : index
      %c8_61 = arith.constant 8 : index
      %c0_62 = arith.constant 0 : index
      %81 = vector.load %arg17[%c0_60, %c8_61, %c0_62] : memref<2x16x32xbf16, #tpu.memory_space<vmem>>, vector<2x8x32xbf16>
      %82 = vector.shape_cast %81 : vector<2x8x32xbf16> to vector<16x32xbf16>
      %83 = vector.extract_strided_slice %7 {offsets = [128, 0], sizes = [32, 64], strides = [1, 1]} : vector<160x64xbf16> to vector<32x64xbf16>
      %cst_63 = arith.constant dense<0.000000e+00> : vector<16x64xf32>
      %84 = tpu.matmul %82, %83, %cst_63 {dimension_numbers = #tpu.dot_dimension_numbers<[1], [0], [0], [1], [0, 0, 1, 1], [], []>} : vector<16x32xbf16>, vector<32x64xbf16>, vector<16x64xf32> -> vector<16x64xf32>
      %85 = arith.addf %80, %84 : vector<16x64xf32>
      %86 = vector.extract_strided_slice %85 {offsets = [0, 0], sizes = [16, 32], strides = [1, 1]} : vector<16x64xf32> to vector<16x32xf32>
      %87 = vector.extract_strided_slice %85 {offsets = [0, 32], sizes = [16, 32], strides = [1, 1]} : vector<16x64xf32> to vector<16x32xf32>
      %88 = arith.negf %87 : vector<16x32xf32>
      %89 = math.exp %88 : vector<16x32xf32>
      %cst_64 = arith.constant 1.000000e+00 : f32
      %90 = vector.broadcast %cst_64 : f32 to vector<16x32xf32>
      %91 = arith.addf %90, %89 : vector<16x32xf32>
      %92 = arith.divf %90, %91 : vector<16x32xf32>
      %93 = arith.mulf %86, %92 : vector<16x32xf32>
      %94 = arith.truncf %93 : vector<16x32xf32> to vector<16x32xbf16>
      %cst_65 = arith.constant dense<0.000000e+00> : vector<16x32xf32>
      %95 = tpu.matmul %94, %11, %cst_65 {dimension_numbers = #tpu.dot_dimension_numbers<[1], [0], [0], [1], [0, 0, 1, 1], [], []>} : vector<16x32xbf16>, vector<32x32xbf16>, vector<16x32xf32> -> vector<16x32xf32>
      %96 = arith.addf %95, %15 : vector<16x32xf32>
      %97 = arith.truncf %96 : vector<16x32xf32> to vector<16x32xbf16>
      %98 = vector.shape_cast %97 : vector<16x32xbf16> to vector<2x8x32xbf16>
      "tpu.trace_start"() <{level = 10 : i32, message = "bte,bes->bts"}> : () -> ()
      %cst_66 = arith.constant dense<0.000000e+00> : vector<2x8x128xf32>
      %99 = tpu.matmul %98, %20, %cst_66 {dimension_numbers = #tpu.dot_dimension_numbers<[2], [1], [1], [2], [0, 0, 0, 1, 1, 2], [0], [0]>} : vector<2x8x32xbf16>, vector<2x32x128xbf16>, vector<2x8x128xf32> -> vector<2x8x128xf32>
      "tpu.trace_stop"() : () -> ()
      %100 = vector.shape_cast %26 : vector<1x128xf32> to vector<1x1x128xf32>
      %101 = vector.broadcast %100 : vector<1x1x128xf32> to vector<2x8x128xf32>
      %102 = arith.addf %99, %101 : vector<2x8x128xf32>
      %cst_67 = arith.constant dense<0xFF800000> : vector<2x8xf32>
      %103 = vector.multi_reduction <maximumf>, %102, %cst_67 [2] : vector<2x8x128xf32> to vector<2x8xf32>
      %104 = vector.shape_cast %103 : vector<2x8xf32> to vector<2x8x1xf32>
      %105 = vector.broadcast %104 : vector<2x8x1xf32> to vector<2x8x128xf32>
      %106 = arith.subf %102, %105 : vector<2x8x128xf32>
      %107 = math.exp %106 : vector<2x8x128xf32>
      %cst_68 = arith.constant dense<0.000000e+00> : vector<2x8xf32>
      %108 = vector.multi_reduction <add>, %107, %cst_68 [2] : vector<2x8x128xf32> to vector<2x8xf32>
      %109 = vector.shape_cast %108 : vector<2x8xf32> to vector<2x8x1xf32>
      %110 = vector.broadcast %109 : vector<2x8x1xf32> to vector<2x8x128xf32>
      %111 = arith.divf %107, %110 : vector<2x8x128xf32>
      %112 = arith.truncf %111 : vector<2x8x128xf32> to vector<2x8x128xbf16>
      "tpu.trace_start"() <{level = 10 : i32, message = "bts,bse->bte"}> : () -> ()
      %cst_69 = arith.constant dense<0.000000e+00> : vector<2x8x32xf32>
      %113 = tpu.matmul %112, %19, %cst_69 {dimension_numbers = #tpu.dot_dimension_numbers<[2], [1], [1], [2], [0, 0, 0, 1, 1, 2], [0], [0]>} : vector<2x8x128xbf16>, vector<2x128x32xbf16>, vector<2x8x32xf32> -> vector<2x8x32xf32>
      "tpu.trace_stop"() : () -> ()
      %cst_70 = arith.constant 8.000000e+00 : f32
      %114 = vector.broadcast %cst_70 : f32 to vector<2x8x32xf32>
      %115 = arith.mulf %113, %114 : vector<2x8x32xf32>
      %116 = vector.shape_cast %115 : vector<2x8x32xf32> to vector<16x32xf32>
      %117 = arith.truncf %116 : vector<16x32xf32> to vector<16x32xbf16>
      %cst_71 = arith.constant dense<0.000000e+00> : vector<16x32xf32>
      %118 = tpu.matmul %117, %12, %cst_71 {dimension_numbers = #tpu.dot_dimension_numbers<[1], [0], [0], [1], [0, 0, 1, 1], [], []>} : vector<16x32xbf16>, vector<32x32xbf16>, vector<16x32xf32> -> vector<16x32xf32>
      %119 = arith.addf %118, %18 : vector<16x32xf32>
      %120 = arith.addf %119, %93 : vector<16x32xf32>
      %cst_72 = arith.constant 0.707106769 : f32
      %121 = vector.broadcast %cst_72 : f32 to vector<16x32xf32>
      %122 = arith.mulf %120, %121 : vector<16x32xf32>
      scf.yield %122 : vector<16x32xf32>
    }
    %31 = arith.addf %30, %6 : vector<16x32xf32>
    %cst_30 = arith.constant 0.707106769 : f32
    %32 = vector.broadcast %cst_30 : f32 to vector<16x32xf32>
    %33 = arith.mulf %31, %32 : vector<16x32xf32>
    %34 = arith.truncf %33 : vector<16x32xf32> to vector<16x32xbf16>
    %c0_31 = arith.constant 0 : index
    %c0_32 = arith.constant 0 : index
    %35 = vector.load %arg12[%c0_31, %c0_32] : memref<32x32xbf16, #tpu.memory_space<vmem>>, vector<32x32xbf16>
    %cst_33 = arith.constant dense<0.000000e+00> : vector<16x32xf32>
    %36 = tpu.matmul %34, %35, %cst_33 {dimension_numbers = #tpu.dot_dimension_numbers<[1], [0], [0], [1], [0, 0, 1, 1], [], []>} : vector<16x32xbf16>, vector<32x32xbf16>, vector<16x32xf32> -> vector<16x32xf32>
    %c0_34 = arith.constant 0 : index
    %c0_35 = arith.constant 0 : index
    %37 = vector.load %arg13[%c0_34, %c0_35] : memref<1x32xf32, #tpu.memory_space<vmem>>, vector<1x32xf32>
    %38 = vector.broadcast %37 : vector<1x32xf32> to vector<16x32xf32>
    %39 = arith.addf %36, %38 : vector<16x32xf32>
    %40 = arith.truncf %39 : vector<16x32xf32> to vector<16x32xbf16>
    %c0_36 = arith.constant 0 : index
    %c0_37 = arith.constant 0 : index
    %41 = vector.load %arg14[%c0_36, %c0_37] : memref<32x128xbf16, #tpu.memory_space<vmem>>, vector<32x128xbf16>
    %cst_38 = arith.constant dense<0.000000e+00> : vector<16x128xf32>
    %42 = tpu.matmul %40, %41, %cst_38 {dimension_numbers = #tpu.dot_dimension_numbers<[1], [0], [0], [1], [0, 0, 1, 1], [], []>} : vector<16x32xbf16>, vector<32x128xbf16>, vector<16x128xf32> -> vector<16x128xf32>
    %c0_39 = arith.constant 0 : index
    %c0_40 = arith.constant 0 : index
    %43 = vector.load %arg15[%c0_39, %c0_40] : memref<1x128xf32, #tpu.memory_space<vmem>>, vector<1x128xf32>
    %44 = vector.broadcast %43 : vector<1x128xf32> to vector<16x128xf32>
    %45 = arith.addf %42, %44 : vector<16x128xf32>
    %cst_41 = arith.constant dense<0xFF800000> : vector<16xf32>
    %46 = vector.multi_reduction <maximumf>, %45, %cst_41 [1] : vector<16x128xf32> to vector<16xf32>
    %47 = vector.shape_cast %46 : vector<16xf32> to vector<16x1xf32>
    %48 = vector.broadcast %47 : vector<16x1xf32> to vector<16x128xf32>
    %49 = arith.subf %45, %48 : vector<16x128xf32>
    %50 = math.exp %49 : vector<16x128xf32>
    %cst_42 = arith.constant dense<0.000000e+00> : vector<16xf32>
    %51 = vector.multi_reduction <add>, %50, %cst_42 [1] : vector<16x128xf32> to vector<16xf32>
    %52 = vector.shape_cast %51 : vector<16xf32> to vector<16x1xf32>
    %53 = math.log %52 : vector<16x1xf32>
    %54 = vector.broadcast %53 : vector<16x1xf32> to vector<16x128xf32>
    %55 = arith.subf %49, %54 : vector<16x128xf32>
    %56 = vector.shape_cast %55 : vector<16x128xf32> to vector<2x8x128xf32>
    %c0_43 = arith.constant 0 : index
    %c0_44 = arith.constant 0 : index
    %c0_45 = arith.constant 0 : index
    %57 = vector.load %arg16[%c0_43, %c0_44, %c0_45] : memref<2x8x128xf32, #tpu.memory_space<vmem>>, vector<2x8x128xf32>
    tpu.vector_store %arg16[%c0_43, %c0_44, %c0_45], %56 {strides = array<i32>} : memref<2x8x128xf32, #tpu.memory_space<vmem>>, vector<2x8x128xf32>,
    return
  }
  func.func @transform_0(%arg0: i32) -> (i32, i32, i32) {
    %c0_i32 = arith.constant 0 : i32
    %c0_i32_0 = arith.constant 0 : i32
    %c0_i32_1 = arith.constant 0 : i32
    return %arg0, %c0_i32, %c0_i32_0 : i32, i32, i32
  }
  func.func @transform_1(%arg0: i32) -> (i32, i32, i32) {
    %c0_i32 = arith.constant 0 : i32
    %c0_i32_0 = arith.constant 0 : i32
    %c0_i32_1 = arith.constant 0 : i32
    return %arg0, %c0_i32, %c0_i32_0 : i32, i32, i32
  }
  func.func @transform_2(%arg0: i32) -> (i32, i32, i32) {
    %c0_i32 = arith.constant 0 : i32
    %c0_i32_0 = arith.constant 0 : i32
    %c0_i32_1 = arith.constant 0 : i32
    return %arg0, %c0_i32, %c0_i32_0 : i32, i32, i32
  }
  func.func @transform_3(%arg0: i32) -> (i32, i32) {
    %c0_i32 = arith.constant 0 : i32
    %c0_i32_0 = arith.constant 0 : i32
    %c0_i32_1 = arith.constant 0 : i32
    return %c0_i32, %c0_i32_0 : i32, i32
  }
  func.func @transform_4(%arg0: i32) -> (i32, i32) {
    %c0_i32 = arith.constant 0 : i32
    %c0_i32_0 = arith.constant 0 : i32
    %c0_i32_1 = arith.constant 0 : i32
    return %c0_i32, %c0_i32_0 : i32, i32
  }
  func.func @transform_5(%arg0: i32) -> (i32, i32) {
    %c0_i32 = arith.constant 0 : i32
    %c0_i32_0 = arith.constant 0 : i32
    %c0_i32_1 = arith.constant 0 : i32
    return %c0_i32, %c0_i32_0 : i32, i32
  }
  func.func @transform_6(%arg0: i32) -> (i32, i32) {
    %c0_i32 = arith.constant 0 : i32
    %c0_i32_0 = arith.constant 0 : i32
    %c0_i32_1 = arith.constant 0 : i32
    return %c0_i32, %c0_i32_0 : i32, i32
  }
  func.func @transform_7(%arg0: i32) -> (i32, i32) {
    %c0_i32 = arith.constant 0 : i32
    %c0_i32_0 = arith.constant 0 : i32
    %c0_i32_1 = arith.constant 0 : i32
    return %c0_i32, %c0_i32_0 : i32, i32
  }
  func.func @transform_8(%arg0: i32) -> (i32, i32) {
    %c0_i32 = arith.constant 0 : i32
    %c0_i32_0 = arith.constant 0 : i32
    %c0_i32_1 = arith.constant 0 : i32
    return %c0_i32, %c0_i32_0 : i32, i32
  }
  func.func @transform_9(%arg0: i32) -> (i32, i32) {
    %c0_i32 = arith.constant 0 : i32
    %c0_i32_0 = arith.constant 0 : i32
    %c0_i32_1 = arith.constant 0 : i32
    return %c0_i32, %c0_i32_0 : i32, i32
  }
  func.func @transform_10(%arg0: i32) -> (i32, i32) {
    %c0_i32 = arith.constant 0 : i32
    %c0_i32_0 = arith.constant 0 : i32
    %c0_i32_1 = arith.constant 0 : i32
    return %c0_i32, %c0_i32_0 : i32, i32
  }
  func.func @transform_11(%arg0: i32) -> (i32, i32) {
    %c0_i32 = arith.constant 0 : i32
    %c0_i32_0 = arith.constant 0 : i32
    %c0_i32_1 = arith.constant 0 : i32
    return %c0_i32, %c0_i32_0 : i32, i32
  }
  func.func @transform_12(%arg0: i32) -> (i32, i32) {
    %c0_i32 = arith.constant 0 : i32
    %c0_i32_0 = arith.constant 0 : i32
    %c0_i32_1 = arith.constant 0 : i32
    return %c0_i32, %c0_i32_0 : i32, i32
  }
  func.func @transform_13(%arg0: i32) -> (i32, i32) {
    %c0_i32 = arith.constant 0 : i32
    %c0_i32_0 = arith.constant 0 : i32
    %c0_i32_1 = arith.constant 0 : i32
    return %c0_i32, %c0_i32_0 : i32, i32
  }
  func.func @transform_14(%arg0: i32) -> (i32, i32) {
    %c0_i32 = arith.constant 0 : i32
    %c0_i32_0 = arith.constant 0 : i32
    %c0_i32_1 = arith.constant 0 : i32
    return %c0_i32, %c0_i32_0 : i32, i32
  }
  func.func @transform_15(%arg0: i32) -> (i32, i32, i32) {
    %c0_i32 = arith.constant 0 : i32
    %c0_i32_0 = arith.constant 0 : i32
    %c0_i32_1 = arith.constant 0 : i32
    return %arg0, %c0_i32, %c0_i32_0 : i32, i32, i32
  }
}

</mosaic_0001>

<llo_original>
// kernel: tpu_custom_call.1
$region0: #{tpu_custom_call.1}
  #allocation0 [shape = 'u32[]', space=smem, size = 0x4, offset = 0x4, fixed_abs, tag = 'smem constant byte address 0x4 - core index']
  #allocation1 [shape = 'u32[144,128]{1,0:T(1,128)}', space=vmem, size = 0x12000, scoped, tag = 'internal scratch']
  #allocation2 [shape = 'bf16[2,16,32]{2,1,0:T(16,128)(2,1)}', space=vmem, size = 0x2000, scoped, tag = 'scratch operand']
  %s0 = inlined_call_operand.vmem [shape: bf16[2,8,32], index: 0, kind: input, shape index: {}]
  %s1 = inlined_call_operand.vmem [shape: bf16[2,128,32], index: 1, kind: input, shape index: {}]
  %s2 = inlined_call_operand.vmem [shape: bf16[2,32,128], index: 2, kind: input, shape index: {}]
  %s3 = inlined_call_operand.vmem [shape: bf16[32,32], index: 3, kind: input, shape index: {}]
  %s4 = inlined_call_operand.vmem [shape: f32[1,32], index: 4, kind: input, shape index: {}]
  %s5 = inlined_call_operand.vmem [shape: bf16[160,64], index: 5, kind: input, shape index: {}]
  %s6 = inlined_call_operand.vmem [shape: f32[1,64], index: 6, kind: input, shape index: {}]
  %s7 = inlined_call_operand.vmem [shape: bf16[32,32], index: 7, kind: input, shape index: {}]
  %s8 = inlined_call_operand.vmem [shape: f32[1,32], index: 8, kind: input, shape index: {}]
  %s9 = inlined_call_operand.vmem [shape: bf16[32,32], index: 9, kind: input, shape index: {}]
  %s10 = inlined_call_operand.vmem [shape: f32[1,32], index: 10, kind: input, shape index: {}]
  %s11 = inlined_call_operand.vmem [shape: bf16[32,32], index: 11, kind: input, shape index: {}]
  %s12 = inlined_call_operand.vmem [shape: f32[1,32], index: 12, kind: input, shape index: {}]
  %s13 = inlined_call_operand.vmem [shape: bf16[32,128], index: 13, kind: input, shape index: {}]
  %s14 = inlined_call_operand.vmem [shape: f32[1,128], index: 14, kind: input, shape index: {}]
  %s15 = inlined_call_operand.hbm [shape: f32[2,8,128], index: 15, kind: output, shape index: {}]
  %s16 = sld [smem:[#allocation0]]
  $region77: #{tpu_custom_call.1} parent=0
    _
  %s18 = ssub.s32 1, %s16
  %s19 = scalar_select 0, %s18, %s16
  $region1: #{tpu_custom_call.1} parent=0
    #allocation3 [shape = 'u8[8192]{0}', space=vmem, size = 0x2000, scoped, tag = 'output window, operand 0, single buffered']
    #allocation4 [shape = 's32[1]{0}', space=sflag, size = 0x4, scoped, tag = 'scoped memory for tpu_custom_call.1']
    %20 = vsyncpa [#allocation4], 0
    // Predicated region
    $region2: #{tpu_custom_call.1} parent=1 // pred_check
      _
    $region3: #{tpu_custom_call.1} parent=1 // pred_check_branch
      %22 = sbr.rel (0) target = $region5
    $region4: #{tpu_custom_call.1} parent=1 // pred_region
      _
    $region5: #{tpu_custom_call.1} parent=1 // pred_fallthru
      _
    // Predicated region
    $region6: #{tpu_custom_call.1} parent=1 // pred_check
      _
    $region7: #{tpu_custom_call.1} parent=1 // pred_check_branch
      %24 = sbr.rel (0) target = $region9
    $region8: #{tpu_custom_call.1} parent=1 // pred_region
      _
    $region9: #{tpu_custom_call.1} parent=1 // pred_fallthru
      _
    // Predicated region
    $region10: #{tpu_custom_call.1} parent=1 // pred_check
      _
    $region11: #{tpu_custom_call.1} parent=1 // pred_check_branch
      %26 = sbr.rel (0) target = $region13
    $region12: #{tpu_custom_call.1} parent=1 // pred_region
      _
    $region13: #{tpu_custom_call.1} parent=1 // pred_fallthru
      _
    // Predicated region
    $region14: #{tpu_custom_call.1} parent=1 // pred_check
      _
    $region15: #{tpu_custom_call.1} parent=1 // pred_check_branch
      %28 = sbr.rel (0) target = $region17
    $region16: #{tpu_custom_call.1} parent=1 // pred_region
      _
    $region17: #{tpu_custom_call.1} parent=1 // pred_fallthru
      _
    // Predicated region
    $region18: #{tpu_custom_call.1} parent=1 // pred_check
      _
    $region19: #{tpu_custom_call.1} parent=1 // pred_check_branch
      %30 = sbr.rel (0) target = $region21
    $region20: #{tpu_custom_call.1} parent=1 // pred_region
      _
    $region21: #{tpu_custom_call.1} parent=1 // pred_fallthru
      _
    // Predicated region
    $region22: #{tpu_custom_call.1} parent=1 // pred_check
      _
    $region23: #{tpu_custom_call.1} parent=1 // pred_check_branch
      %32 = sbr.rel (0) target = $region25
    $region24: #{tpu_custom_call.1} parent=1 // pred_region
      _
    $region25: #{tpu_custom_call.1} parent=1 // pred_fallthru
      _
    // Predicated region
    $region26: #{tpu_custom_call.1} parent=1 // pred_check
      _
    $region27: #{tpu_custom_call.1} parent=1 // pred_check_branch
      %34 = sbr.rel (0) target = $region29
    $region28: #{tpu_custom_call.1} parent=1 // pred_region
      _
    $region29: #{tpu_custom_call.1} parent=1 // pred_fallthru
      _
    // Predicated region
    $region30: #{tpu_custom_call.1} parent=1 // pred_check
      _
    $region31: #{tpu_custom_call.1} parent=1 // pred_check_branch
      %36 = sbr.rel (0) target = $region33
    $region32: #{tpu_custom_call.1} parent=1 // pred_region
      _
    $region33: #{tpu_custom_call.1} parent=1 // pred_fallthru
      _
    // Predicated region
    $region34: #{tpu_custom_call.1} parent=1 // pred_check
      _
    $region35: #{tpu_custom_call.1} parent=1 // pred_check_branch
      %38 = sbr.rel (0) target = $region37
    $region36: #{tpu_custom_call.1} parent=1 // pred_region
      _
    $region37: #{tpu_custom_call.1} parent=1 // pred_fallthru
      _
    // Predicated region
    $region38: #{tpu_custom_call.1} parent=1 // pred_check
      _
    $region39: #{tpu_custom_call.1} parent=1 // pred_check_branch
      %40 = sbr.rel (0) target = $region41
    $region40: #{tpu_custom_call.1} parent=1 // pred_region
      _
    $region41: #{tpu_custom_call.1} parent=1 // pred_fallthru
      _
    // Predicated region
    $region42: #{tpu_custom_call.1} parent=1 // pred_check
      _
    $region43: #{tpu_custom_call.1} parent=1 // pred_check_branch
      %42 = sbr.rel (0) target = $region45
    $region44: #{tpu_custom_call.1} parent=1 // pred_region
      _
    $region45: #{tpu_custom_call.1} parent=1 // pred_fallthru
      _
    // Predicated region
    $region46: #{tpu_custom_call.1} parent=1 // pred_check
      _
    $region47: #{tpu_custom_call.1} parent=1 // pred_check_branch
      %44 = sbr.rel (0) target = $region49
    $region48: #{tpu_custom_call.1} parent=1 // pred_region
      _
    $region49: #{tpu_custom_call.1} parent=1 // pred_fallthru
      _
    // Predicated region
    $region50: #{tpu_custom_call.1} parent=1 // pred_check
      _
    $region51: #{tpu_custom_call.1} parent=1 // pred_check_branch
      %46 = sbr.rel (0) target = $region53
    $region52: #{tpu_custom_call.1} parent=1 // pred_region
      _
    $region53: #{tpu_custom_call.1} parent=1 // pred_fallthru
      _
    // Predicated region
    $region54: #{tpu_custom_call.1} parent=1 // pred_check
      _
    $region55: #{tpu_custom_call.1} parent=1 // pred_check_branch
      %48 = sbr.rel (0) target = $region57
    $region56: #{tpu_custom_call.1} parent=1 // pred_region
      _
    $region57: #{tpu_custom_call.1} parent=1 // pred_fallthru
      _
    // Predicated region
    $region58: #{tpu_custom_call.1} parent=1 // pred_check
      _
    $region59: #{tpu_custom_call.1} parent=1 // pred_check_branch
      %50 = sbr.rel (0) target = $region61
    $region60: #{tpu_custom_call.1} parent=1 // pred_region
      _
    $region61: #{tpu_custom_call.1} parent=1 // pred_fallthru
      _
    %v52 = vld [vmem:[%s0] sm:$0xf]
    %v53 = vld [vmem:[%s0 + $0x4] sm:$0xf]
    %v54 = vld [vmem:[%s3] sm:$0xf]
    %v55 = vld [vmem:[%s3 + $0x4] sm:$0xf]
    %v56 = vld [vmem:[%s3 + $0x8] sm:$0xf]
    %v57 = vld [vmem:[%s3 + $0xc] sm:$0xf]
    %v58 = vld [vmem:[%s4] sm:$0x1]
    %v60 = vlaneseq
    %v61 = vshrl.u32 %v60, 7
    %v62 = vsub.s32 0, %v61
    %v63 = vrot.slane %v58, %v62
    %v67 = vunpack.c.l.b16 %v52
    %v68 = vunpack.c.l.b16 %v53
    %v69 = vpack.c.b16 %v68, %v67
    %v74 = vunpack.c.l.b16 %v54
    %v75 = vunpack.c.l.b16 %v55
    %v76 = vunpack.c.l.b16 %v56
    %v77 = vunpack.c.l.b16 %v57
    %v78 = vpack.c.b16 %v75, %v74
    %v79 = vpack.c.b16 %v77, %v76
    %vm82 = vcmask 261120
    %v84 = vsel %vm82, %v69, 0
    %86 = vmatprep.subr.bf16.mxu0 0
    %87 = vmatpush1.bf16.msra.mxu0 %v78
    %88 = vmatprep.subr.bf16.mxu0 0
    %89 = vmatpush1.bf16.msra.mxu0 %v79
    %90 = vmatprep.subr.bf16.mxu0 0
    %91 = vmatpush1.bf16.msra.mxu0 0
    %92 = vmatprep.subr.bf16.mxu0 0
    %93 = vmatpush1.bf16.msra.mxu0 0
    %94 = vmatprep.subr.bf16.mxu0 0
    %95 = vmatpush1.bf16.msra.mxu0 0
    %96 = vmatprep.subr.bf16.mxu0 0
    %97 = vmatpush1.bf16.msra.mxu0 0
    %98 = vmatprep.subr.bf16.mxu0 0
    %99 = vmatpush1.bf16.msra.mxu0 0
    %100 = vmatprep.subr.bf16.mxu0 0
    %101 = vmatpush1.bf16.msra.mxu0 0
    %102 = vmatprep.subr.bf16.mxu0 0
    %103 = vmatpush1.bf16.msra.mxu0 0
    %104 = vmatprep.subr.bf16.mxu0 0
    %105 = vmatpush1.bf16.msra.mxu0 0
    %106 = vmatprep.subr.bf16.mxu0 0
    %107 = vmatpush1.bf16.msra.mxu0 0
    %108 = vmatprep.subr.bf16.mxu0 0
    %109 = vmatpush1.bf16.msra.mxu0 0
    %110 = vmatprep.subr.bf16.mxu0 0
    %111 = vmatpush1.bf16.msra.mxu0 0
    %112 = vmatprep.subr.bf16.mxu0 0
    %113 = vmatpush1.bf16.msra.mxu0 0
    %114 = vmatprep.subr.bf16.mxu0 0
    %115 = vmatpush1.bf16.msra.mxu0 0
    %116 = vmatprep.subr.bf16.mxu0 0
    %117 = vmatpush1.bf16.msra.mxu0 0
    %118 = vmatprep.mubr.bf16.mxu0 0
    %119 = vmatmul.mubr.bf16.gmra.mrb[0].mxu0 %v84
    %v120 = vpop.f32.mrb[0].mxu0
    %v121 = vadd.f32 %v63, %v120
    %v122 = vpop.f32.mrb[0].mxu0
    %v123 = vpop.f32.mrb[0].mxu0
    %v124 = vadd.f32 %v63, %v123
    %v125 = vpop.f32.mrb[0].mxu0
    %126 = vdwg.mxu0
    %v127 = vld [vmem:[%s5] sm:$0xf]
    %v128 = vld [vmem:[%s5 + $0x4] sm:$0xf]
    %v129 = vld [vmem:[%s5 + $0x8] sm:$0xf]
    %v130 = vld [vmem:[%s5 + $0xc] sm:$0xf]
    %v131 = vld [vmem:[%s5 + $0x10] sm:$0xf]
    %v132 = vld [vmem:[%s5 + $0x14] sm:$0xf]
    %v133 = vld [vmem:[%s5 + $0x18] sm:$0xf]
    %v134 = vld [vmem:[%s5 + $0x1c] sm:$0xf]
    %v135 = vld [vmem:[%s5 + $0x20] sm:$0xf]
    %v136 = vld [vmem:[%s5 + $0x24] sm:$0xf]
    %v137 = vld [vmem:[%s5 + $0x28] sm:$0xf]
    %v138 = vld [vmem:[%s5 + $0x2c] sm:$0xf]
    %v139 = vld [vmem:[%s5 + $0x30] sm:$0xf]
    %v140 = vld [vmem:[%s5 + $0x34] sm:$0xf]
    %v141 = vld [vmem:[%s5 + $0x38] sm:$0xf]
    %v142 = vld [vmem:[%s5 + $0x3c] sm:$0xf]
    %v143 = vld [vmem:[%s5 + $0x40] sm:$0xf]
    %v144 = vld [vmem:[%s5 + $0x44] sm:$0xf]
    %v145 = vld [vmem:[%s5 + $0x48] sm:$0xf]
    %v146 = vld [vmem:[%s5 + $0x4c] sm:$0xf]
    %v147 = vld [vmem:[%s6] sm:$0x1]
    %v149 = vlaneseq
    %v150 = vshrl.u32 %v149, 7
    %v151 = vsub.s32 0, %v150
    %v152 = vrot.slane %v147, %v151
    %v154 = vld [vmem:[%s7] sm:$0xf]
    %v155 = vld [vmem:[%s7 + $0x4] sm:$0xf]
    %v156 = vld [vmem:[%s7 + $0x8] sm:$0xf]
    %v157 = vld [vmem:[%s7 + $0xc] sm:$0xf]
    %v158 = vld [vmem:[%s9] sm:$0xf]
    %v159 = vld [vmem:[%s9 + $0x4] sm:$0xf]
    %v160 = vld [vmem:[%s9 + $0x8] sm:$0xf]
    %v161 = vld [vmem:[%s9 + $0xc] sm:$0xf]
    %v162 = vld [vmem:[%s8] sm:$0x1]
    %v164 = vlaneseq
    %v165 = vshrl.u32 %v164, 7
    %v166 = vsub.s32 0, %v165
    %v167 = vrot.slane %v162, %v166
    %v169 = vld [vmem:[%s10] sm:$0x1]
    %v171 = vlaneseq
    %v172 = vshrl.u32 %v171, 7
    %v173 = vsub.s32 0, %v172
    %v174 = vrot.slane %v169, %v173
    %v176 = vld [vmem:[%s1] sm:$0xf]
    %v177 = vld [vmem:[%s1 + $0x4] sm:$0xf]
    %v178 = vld [vmem:[%s1 + $0x8] sm:$0xf]
    %v179 = vld [vmem:[%s1 + $0xc] sm:$0xf]
    %v180 = vld [vmem:[%s1 + $0x10] sm:$0xf]
    %v181 = vld [vmem:[%s1 + $0x14] sm:$0xf]
    %v182 = vld [vmem:[%s1 + $0x18] sm:$0xf]
    %v183 = vld [vmem:[%s1 + $0x1c] sm:$0xf]
    %v184 = vld [vmem:[%s1 + $0x20] sm:$0xf]
    %v185 = vld [vmem:[%s1 + $0x24] sm:$0xf]
    %v186 = vld [vmem:[%s1 + $0x28] sm:$0xf]
    %v187 = vld [vmem:[%s1 + $0x2c] sm:$0xf]
    %v188 = vld [vmem:[%s1 + $0x30] sm:$0xf]
    %v189 = vld [vmem:[%s1 + $0x34] sm:$0xf]
    %v190 = vld [vmem:[%s1 + $0x38] sm:$0xf]
    %v191 = vld [vmem:[%s1 + $0x3c] sm:$0xf]
    %v192 = vld [vmem:[%s1 + $0x40] sm:$0xf]
    %v193 = vld [vmem:[%s1 + $0x44] sm:$0xf]
    %v194 = vld [vmem:[%s1 + $0x48] sm:$0xf]
    %v195 = vld [vmem:[%s1 + $0x4c] sm:$0xf]
    %v196 = vld [vmem:[%s1 + $0x50] sm:$0xf]
    %v197 = vld [vmem:[%s1 + $0x54] sm:$0xf]
    %v198 = vld [vmem:[%s1 + $0x58] sm:$0xf]
    %v199 = vld [vmem:[%s1 + $0x5c] sm:$0xf]
    %v200 = vld [vmem:[%s1 + $0x60] sm:$0xf]
    %v201 = vld [vmem:[%s1 + $0x64] sm:$0xf]
    %v202 = vld [vmem:[%s1 + $0x68] sm:$0xf]
    %v203 = vld [vmem:[%s1 + $0x6c] sm:$0xf]
    %v204 = vld [vmem:[%s1 + $0x70] sm:$0xf]
    %v205 = vld [vmem:[%s1 + $0x74] sm:$0xf]
    %v206 = vld [vmem:[%s1 + $0x78] sm:$0xf]
    %v207 = vld [vmem:[%s1 + $0x7c] sm:$0xf]
    %v208 = vld [vmem:[%s2] sm:$0xf]
    %v209 = vld [vmem:[%s2 + $0x4] sm:$0xf]
    %v210 = vld [vmem:[%s2 + $0x8] sm:$0xf]
    %v211 = vld [vmem:[%s2 + $0xc] sm:$0xf]
    %v212 = vld [vmem:[%s2 + $0x10] sm:$0xf]
    %v213 = vld [vmem:[%s2 + $0x14] sm:$0xf]
    %v214 = vld [vmem:[%s2 + $0x18] sm:$0xf]
    %v215 = vld [vmem:[%s2 + $0x1c] sm:$0xf]
    %v216 = vlaneseq
    %v217 = vand.u32 %v216, 127
    %vm218 = vcmp.lt.s32.totalorder %v217, 8
    %v219 = vsel %vm218, 0.0, -1e+30
    %vm220 = vcmask 257024
    %221 = vst.msk [vmem:[#allocation2] sm:$0xf] %vm220, 0
    %222 = vst.msk [vmem:[#allocation2 + $0x8] sm:$0xf] %vm220, 0
    loop: start=0, step=1, limit=2
    $region62: #{tpu_custom_call.1} parent=1 // loop_pre_header
      _
    $region63: #{tpu_custom_call.1} parent=1 // loop_header
      %s224 = sphi 0, %s228
      %p225 = scmp.ge.s32.totalorder %s224, 2
      %v229 = vphi %v121, %v1141
      %v230 = vphi %v124, %v1142
    $region64: #{tpu_custom_call.1} parent=1 // loop_header_branch
      %227 = sbr.rel (%p225) target = $region68
    $region65: #{tpu_custom_call.1} parent=1 // loop_body
      %v231 = vpack.c.bf16 %v229, %v229
      %v232 = vpack.c.bf16 %v230, %v230
      %v235 = vrot.slane %v231, 4
      %v236 = vrot.slane %v232, 4
      %vm239 = vcmask 261124
      %240 = vst.msk [vmem:[#allocation2] sm:$0xf0] %vm239, %v235
      %241 = vst.msk [vmem:[#allocation2 + $0x8] sm:$0xf0] %vm239, %v236
      %v242 = vld [vmem:[#allocation2] sm:$0x3c]
      %v243 = vld [vmem:[#allocation2 + $0x8] sm:$0x3c]
      %v246 = vunpack.c.l.b16 %v242
      %v247 = vunpack.c.h.b16 %v242
      %v248 = vunpack.c.l.b16 %v243
      %v249 = vunpack.c.h.b16 %v243
      %v250 = vpack.c.b16 %v246, %v246
      %v251 = vpack.c.b16 %v247, %v247
      %v252 = vpack.c.b16 %v248, %v248
      %v253 = vpack.c.b16 %v249, %v249
      %vm254 = vcmask 1041408
      %vm255 = vcmask 1045508
      %vm256 = vmor %vm254, %vm255
      %v257 = vrot.slane %v250, 6
      %v258 = vrot.slane %v257, 4
      %v259 = vrot.slane %v251, 6
      %v260 = vsel %vm256, %v258, %v259
      %v261 = vrot.slane %v252, 6
      %v262 = vrot.slane %v261, 4
      %v263 = vrot.slane %v253, 6
      %v264 = vsel %vm256, %v262, %v263
      %v265 = vunpack.c.l.b16 %v260
      %v266 = vunpack.c.l.b16 %v264
      %v267 = vpack.c.b16 %v266, %v265
      %v272 = vunpack.c.l.b16 %v127
      %v273 = vunpack.c.l.b16 %v128
      %v274 = vunpack.c.l.b16 %v129
      %v275 = vunpack.c.l.b16 %v130
      %v276 = vpack.c.b16 %v273, %v272
      %v277 = vpack.c.b16 %v275, %v274
      %v281 = vsel %vm82, %v267, 0
      %283 = vmatprep.subr.bf16.mxu0 0
      %284 = vmatpush1.bf16.msra.mxu0 %v276
      %285 = vmatprep.subr.bf16.mxu0 0
      %286 = vmatpush1.bf16.msra.mxu0 %v277
      %287 = vmatprep.subr.bf16.mxu0 0
      %288 = vmatpush1.bf16.msra.mxu0 0
      %289 = vmatprep.subr.bf16.mxu0 0
      %290 = vmatpush1.bf16.msra.mxu0 0
      %291 = vmatprep.subr.bf16.mxu0 0
      %292 = vmatpush1.bf16.msra.mxu0 0
      %293 = vmatprep.subr.bf16.mxu0 0
      %294 = vmatpush1.bf16.msra.mxu0 0
      %295 = vmatprep.subr.bf16.mxu0 0
      %296 = vmatpush1.bf16.msra.mxu0 0
      %297 = vmatprep.subr.bf16.mxu0 0
      %298 = vmatpush1.bf16.msra.mxu0 0
      %299 = vmatprep.subr.bf16.mxu0 0
      %300 = vmatpush1.bf16.msra.mxu0 0
      %301 = vmatprep.subr.bf16.mxu0 0
      %302 = vmatpush1.bf16.msra.mxu0 0
      %303 = vmatprep.subr.bf16.mxu0 0
      %304 = vmatpush1.bf16.msra.mxu0 0
      %305 = vmatprep.subr.bf16.mxu0 0
      %306 = vmatpush1.bf16.msra.mxu0 0
      %307 = vmatprep.subr.bf16.mxu0 0
      %308 = vmatpush1.bf16.msra.mxu0 0
      %309 = vmatprep.subr.bf16.mxu0 0
      %310 = vmatpush1.bf16.msra.mxu0 0
      %311 = vmatprep.subr.bf16.mxu0 0
      %312 = vmatpush1.bf16.msra.mxu0 0
      %313 = vmatprep.subr.bf16.mxu0 0
      %314 = vmatpush1.bf16.msra.mxu0 0
      %315 = vmatprep.mubr.bf16.mxu0 0
      %316 = vmatmul.mubr.bf16.gmra.mrb[0].mxu0 %v281
      %v317 = vpop.f32.mrb[0].mxu0
      %v318 = vadd.f32 0.0, %v317
      %v319 = vpop.f32.mrb[0].mxu0
      %v320 = vpop.f32.mrb[0].mxu0
      %v321 = vadd.f32 0.0, %v320
      %v322 = vpop.f32.mrb[0].mxu0
      %323 = vdwg.mxu0
      %v324 = vadd.f32 %v152, %v318
      %v325 = vadd.f32 %v152, %v321
      %v326 = vld [vmem:[#allocation2] sm:$0x7c]
      %v327 = vld [vmem:[#allocation2 + $0x8] sm:$0x7c]
      %v330 = vunpack.c.l.b16 %v326
      %v331 = vunpack.c.h.b16 %v326
      %v332 = vunpack.c.l.b16 %v327
      %v333 = vunpack.c.h.b16 %v327
      %v334 = vpack.c.b16 %v330, %v330
      %v335 = vpack.c.b16 %v331, %v331
      %v336 = vpack.c.b16 %v332, %v332
      %v337 = vpack.c.b16 %v333, %v333
      %vm338 = vsmask.f32 1280
      %vm339 = vsmask.f32 5392
      %vm340 = vmor %vm338, %vm339
      %v342 = vshrl.u32 %v334, 16
      %v344 = vrot.slane %v342, 6
      %v345 = vshll.u32 %v334, 16
      %v347 = vrot.slane %v345, 7
      %v348 = vor.u32 %v344, %v347
      %v349 = vrot.slane %v348, 4
      %v351 = vshrl.u32 %v335, 16
      %v353 = vrot.slane %v351, 6
      %v354 = vshll.u32 %v335, 16
      %v356 = vrot.slane %v354, 7
      %v357 = vor.u32 %v353, %v356
      %v358 = vsel %vm340, %v349, %v357
      %v360 = vshrl.u32 %v336, 16
      %v362 = vrot.slane %v360, 6
      %v363 = vshll.u32 %v336, 16
      %v365 = vrot.slane %v363, 7
      %v366 = vor.u32 %v362, %v365
      %v367 = vrot.slane %v366, 4
      %v369 = vshrl.u32 %v337, 16
      %v371 = vrot.slane %v369, 6
      %v372 = vshll.u32 %v337, 16
      %v374 = vrot.slane %v372, 7
      %v375 = vor.u32 %v371, %v374
      %v376 = vsel %vm340, %v367, %v375
      %v377 = vunpack.c.l.b16 %v358
      %v378 = vunpack.c.l.b16 %v376
      %v379 = vpack.c.b16 %v378, %v377
      %v384 = vunpack.c.l.b16 %v131
      %v385 = vunpack.c.l.b16 %v132
      %v386 = vunpack.c.l.b16 %v133
      %v387 = vunpack.c.l.b16 %v134
      %v388 = vpack.c.b16 %v385, %v384
      %v389 = vpack.c.b16 %v387, %v386
      %v393 = vsel %vm82, %v379, 0
      %395 = vmatprep.subr.bf16.mxu0 0
      %396 = vmatpush1.bf16.msra.mxu0 %v388
      %397 = vmatprep.subr.bf16.mxu0 0
      %398 = vmatpush1.bf16.msra.mxu0 %v389
      %399 = vmatprep.subr.bf16.mxu0 0
      %400 = vmatpush1.bf16.msra.mxu0 0
      %401 = vmatprep.subr.bf16.mxu0 0
      %402 = vmatpush1.bf16.msra.mxu0 0
      %403 = vmatprep.subr.bf16.mxu0 0
      %404 = vmatpush1.bf16.msra.mxu0 0
      %405 = vmatprep.subr.bf16.mxu0 0
      %406 = vmatpush1.bf16.msra.mxu0 0
      %407 = vmatprep.subr.bf16.mxu0 0
      %408 = vmatpush1.bf16.msra.mxu0 0
      %409 = vmatprep.subr.bf16.mxu0 0
      %410 = vmatpush1.bf16.msra.mxu0 0
      %411 = vmatprep.subr.bf16.mxu0 0
      %412 = vmatpush1.bf16.msra.mxu0 0
      %413 = vmatprep.subr.bf16.mxu0 0
      %414 = vmatpush1.bf16.msra.mxu0 0
      %415 = vmatprep.subr.bf16.mxu0 0
      %416 = vmatpush1.bf16.msra.mxu0 0
      %417 = vmatprep.subr.bf16.mxu0 0
      %418 = vmatpush1.bf16.msra.mxu0 0
      %419 = vmatprep.subr.bf16.mxu0 0
      %420 = vmatpush1.bf16.msra.mxu0 0
      %421 = vmatprep.subr.bf16.mxu0 0
      %422 = vmatpush1.bf16.msra.mxu0 0
      %423 = vmatprep.subr.bf16.mxu0 0
      %424 = vmatpush1.bf16.msra.mxu0 0
      %425 = vmatprep.subr.bf16.mxu0 0
      %426 = vmatpush1.bf16.msra.mxu0 0
      %427 = vmatprep.mubr.bf16.mxu0 0
      %428 = vmatmul.mubr.bf16.gmra.mrb[0].mxu0 %v393
      %v429 = vpop.f32.mrb[0].mxu0
      %v430 = vadd.f32 0.0, %v429
      %v431 = vpop.f32.mrb[0].mxu0
      %v432 = vpop.f32.mrb[0].mxu0
      %v433 = vadd.f32 0.0, %v432
      %v434 = vpop.f32.mrb[0].mxu0
      %435 = vdwg.mxu0
      %v436 = vadd.f32 %v324, %v430
      %v437 = vadd.f32 %v325, %v433
      %v438 = vld [vmem:[#allocation2] sm:$0x78]
      %v439 = vld [vmem:[#allocation2 + $0x8] sm:$0x78]
      %v442 = vunpack.c.l.b16 %v438
      %v443 = vunpack.c.h.b16 %v438
      %v444 = vunpack.c.l.b16 %v439
      %v445 = vunpack.c.h.b16 %v439
      %v446 = vpack.c.b16 %v442, %v442
      %v447 = vpack.c.b16 %v443, %v443
      %v448 = vpack.c.b16 %v444, %v444
      %v449 = vpack.c.b16 %v445, %v445
      %vm450 = vcmask 1040384
      %vm451 = vcmask 1044484
      %vm452 = vmor %vm450, %vm451
      %v453 = vrot.slane %v446, 7
      %v454 = vrot.slane %v453, 4
      %v455 = vrot.slane %v447, 7
      %v456 = vsel %vm452, %v454, %v455
      %v457 = vrot.slane %v448, 7
      %v458 = vrot.slane %v457, 4
      %v459 = vrot.slane %v449, 7
      %v460 = vsel %vm452, %v458, %v459
      %v461 = vunpack.c.l.b16 %v456
      %v462 = vunpack.c.l.b16 %v460
      %v463 = vpack.c.b16 %v462, %v461
      %v468 = vunpack.c.l.b16 %v135
      %v469 = vunpack.c.l.b16 %v136
      %v470 = vunpack.c.l.b16 %v137
      %v471 = vunpack.c.l.b16 %v138
      %v472 = vpack.c.b16 %v469, %v468
      %v473 = vpack.c.b16 %v471, %v470
      %v477 = vsel %vm82, %v463, 0
      %479 = vmatprep.subr.bf16.mxu0 0
      %480 = vmatpush1.bf16.msra.mxu0 %v472
      %481 = vmatprep.subr.bf16.mxu0 0
      %482 = vmatpush1.bf16.msra.mxu0 %v473
      %483 = vmatprep.subr.bf16.mxu0 0
      %484 = vmatpush1.bf16.msra.mxu0 0
      %485 = vmatprep.subr.bf16.mxu0 0
      %486 = vmatpush1.bf16.msra.mxu0 0
      %487 = vmatprep.subr.bf16.mxu0 0
      %488 = vmatpush1.bf16.msra.mxu0 0
      %489 = vmatprep.subr.bf16.mxu0 0
      %490 = vmatpush1.bf16.msra.mxu0 0
      %491 = vmatprep.subr.bf16.mxu0 0
      %492 = vmatpush1.bf16.msra.mxu0 0
      %493 = vmatprep.subr.bf16.mxu0 0
      %494 = vmatpush1.bf16.msra.mxu0 0
      %495 = vmatprep.subr.bf16.mxu0 0
      %496 = vmatpush1.bf16.msra.mxu0 0
      %497 = vmatprep.subr.bf16.mxu0 0
      %498 = vmatpush1.bf16.msra.mxu0 0
      %499 = vmatprep.subr.bf16.mxu0 0
      %500 = vmatpush1.bf16.msra.mxu0 0
      %501 = vmatprep.subr.bf16.mxu0 0
      %502 = vmatpush1.bf16.msra.mxu0 0
      %503 = vmatprep.subr.bf16.mxu0 0
      %504 = vmatpush1.bf16.msra.mxu0 0
      %505 = vmatprep.subr.bf16.mxu0 0
      %506 = vmatpush1.bf16.msra.mxu0 0
      %507 = vmatprep.subr.bf16.mxu0 0
      %508 = vmatpush1.bf16.msra.mxu0 0
      %509 = vmatprep.subr.bf16.mxu0 0
      %510 = vmatpush1.bf16.msra.mxu0 0
      %511 = vmatprep.mubr.bf16.mxu0 0
      %512 = vmatmul.mubr.bf16.gmra.mrb[0].mxu0 %v477
      %v513 = vpop.f32.mrb[0].mxu0
      %v514 = vadd.f32 0.0, %v513
      %v515 = vpop.f32.mrb[0].mxu0
      %v516 = vpop.f32.mrb[0].mxu0
      %v517 = vadd.f32 0.0, %v516
      %v518 = vpop.f32.mrb[0].mxu0
      %519 = vdwg.mxu0
      %v520 = vadd.f32 %v436, %v514
      %v521 = vadd.f32 %v437, %v517
      %v522 = vld [vmem:[#allocation2] sm:$0xf8]
      %v523 = vld [vmem:[#allocation2 + $0x8] sm:$0xf8]
      %v526 = vunpack.c.l.b16 %v522
      %v527 = vunpack.c.h.b16 %v522
      %v528 = vunpack.c.l.b16 %v523
      %v529 = vunpack.c.h.b16 %v523
      %v530 = vpack.c.b16 %v526, %v526
      %v531 = vpack.c.b16 %v527, %v527
      %v532 = vpack.c.b16 %v528, %v528
      %v533 = vpack.c.b16 %v529, %v529
      %vm534 = vsmask.f32 256
      %vm535 = vsmask.f32 4368
      %vm536 = vmor %vm534, %vm535
      %v538 = vshrl.u32 %v530, 16
      %v540 = vrot.slane %v538, 7
      %v541 = vrot.slane %v540, 4
      %v543 = vshrl.u32 %v531, 16
      %v545 = vrot.slane %v543, 7
      %v546 = vshll.u32 %v531, 16
      %v548 = vor.u32 %v545, %v546
      %v549 = vsel %vm536, %v541, %v548
      %v551 = vshrl.u32 %v532, 16
      %v553 = vrot.slane %v551, 7
      %v554 = vrot.slane %v553, 4
      %v556 = vshrl.u32 %v533, 16
      %v558 = vrot.slane %v556, 7
      %v559 = vshll.u32 %v533, 16
      %v561 = vor.u32 %v558, %v559
      %v562 = vsel %vm536, %v554, %v561
      %v563 = vunpack.c.l.b16 %v549
      %v564 = vunpack.c.l.b16 %v562
      %v565 = vpack.c.b16 %v564, %v563
      %v570 = vunpack.c.l.b16 %v139
      %v571 = vunpack.c.l.b16 %v140
      %v572 = vunpack.c.l.b16 %v141
      %v573 = vunpack.c.l.b16 %v142
      %v574 = vpack.c.b16 %v571, %v570
      %v575 = vpack.c.b16 %v573, %v572
      %v579 = vsel %vm82, %v565, 0
      %581 = vmatprep.subr.bf16.mxu0 0
      %582 = vmatpush1.bf16.msra.mxu0 %v574
      %583 = vmatprep.subr.bf16.mxu0 0
      %584 = vmatpush1.bf16.msra.mxu0 %v575
      %585 = vmatprep.subr.bf16.mxu0 0
      %586 = vmatpush1.bf16.msra.mxu0 0
      %587 = vmatprep.subr.bf16.mxu0 0
      %588 = vmatpush1.bf16.msra.mxu0 0
      %589 = vmatprep.subr.bf16.mxu0 0
      %590 = vmatpush1.bf16.msra.mxu0 0
      %591 = vmatprep.subr.bf16.mxu0 0
      %592 = vmatpush1.bf16.msra.mxu0 0
      %593 = vmatprep.subr.bf16.mxu0 0
      %594 = vmatpush1.bf16.msra.mxu0 0
      %595 = vmatprep.subr.bf16.mxu0 0
      %596 = vmatpush1.bf16.msra.mxu0 0
      %597 = vmatprep.subr.bf16.mxu0 0
      %598 = vmatpush1.bf16.msra.mxu0 0
      %599 = vmatprep.subr.bf16.mxu0 0
      %600 = vmatpush1.bf16.msra.mxu0 0
      %601 = vmatprep.subr.bf16.mxu0 0
      %602 = vmatpush1.bf16.msra.mxu0 0
      %603 = vmatprep.subr.bf16.mxu0 0
      %604 = vmatpush1.bf16.msra.mxu0 0
      %605 = vmatprep.subr.bf16.mxu0 0
      %606 = vmatpush1.bf16.msra.mxu0 0
      %607 = vmatprep.subr.bf16.mxu0 0
      %608 = vmatpush1.bf16.msra.mxu0 0
      %609 = vmatprep.subr.bf16.mxu0 0
      %610 = vmatpush1.bf16.msra.mxu0 0
      %611 = vmatprep.subr.bf16.mxu0 0
      %612 = vmatpush1.bf16.msra.mxu0 0
      %613 = vmatprep.mubr.bf16.mxu0 0
      %614 = vmatmul.mubr.bf16.gmra.mrb[0].mxu0 %v579
      %v615 = vpop.f32.mrb[0].mxu0
      %v616 = vadd.f32 0.0, %v615
      %v617 = vpop.f32.mrb[0].mxu0
      %v618 = vpop.f32.mrb[0].mxu0
      %v619 = vadd.f32 0.0, %v618
      %v620 = vpop.f32.mrb[0].mxu0
      %621 = vdwg.mxu0
      %v622 = vadd.f32 %v520, %v616
      %v623 = vadd.f32 %v521, %v619
      %v624 = vld [vmem:[#allocation2] sm:$0xf0]
      %v625 = vld [vmem:[#allocation2 + $0x8] sm:$0xf0]
      %v628 = vunpack.c.h.b16 %v624
      %v629 = vunpack.c.h.b16 %v625
      %v630 = vpack.c.b16 %v629, %v628
      %v635 = vunpack.c.l.b16 %v143
      %v636 = vunpack.c.l.b16 %v144
      %v637 = vunpack.c.l.b16 %v145
      %v638 = vunpack.c.l.b16 %v146
      %v639 = vpack.c.b16 %v636, %v635
      %v640 = vpack.c.b16 %v638, %v637
      %v644 = vsel %vm82, %v630, 0
      %646 = vmatprep.subr.bf16.mxu0 0
      %647 = vmatpush1.bf16.msra.mxu0 %v639
      %648 = vmatprep.subr.bf16.mxu0 0
      %649 = vmatpush1.bf16.msra.mxu0 %v640
      %650 = vmatprep.subr.bf16.mxu0 0
      %651 = vmatpush1.bf16.msra.mxu0 0
      %652 = vmatprep.subr.bf16.mxu0 0
      %653 = vmatpush1.bf16.msra.mxu0 0
      %654 = vmatprep.subr.bf16.mxu0 0
      %655 = vmatpush1.bf16.msra.mxu0 0
      %656 = vmatprep.subr.bf16.mxu0 0
      %657 = vmatpush1.bf16.msra.mxu0 0
      %658 = vmatprep.subr.bf16.mxu0 0
      %659 = vmatpush1.bf16.msra.mxu0 0
      %660 = vmatprep.subr.bf16.mxu0 0
      %661 = vmatpush1.bf16.msra.mxu0 0
      %662 = vmatprep.subr.bf16.mxu0 0
      %663 = vmatpush1.bf16.msra.mxu0 0
      %664 = vmatprep.subr.bf16.mxu0 0
      %665 = vmatpush1.bf16.msra.mxu0 0
      %666 = vmatprep.subr.bf16.mxu0 0
      %667 = vmatpush1.bf16.msra.mxu0 0
      %668 = vmatprep.subr.bf16.mxu0 0
      %669 = vmatpush1.bf16.msra.mxu0 0
      %670 = vmatprep.subr.bf16.mxu0 0
      %671 = vmatpush1.bf16.msra.mxu0 0
      %672 = vmatprep.subr.bf16.mxu0 0
      %673 = vmatpush1.bf16.msra.mxu0 0
      %674 = vmatprep.subr.bf16.mxu0 0
      %675 = vmatpush1.bf16.msra.mxu0 0
      %676 = vmatprep.subr.bf16.mxu0 0
      %677 = vmatpush1.bf16.msra.mxu0 0
      %678 = vmatprep.mubr.bf16.mxu0 0
      %679 = vmatmul.mubr.bf16.gmra.mrb[0].mxu0 %v644
      %v680 = vpop.f32.mrb[0].mxu0
      %v681 = vadd.f32 0.0, %v680
      %v682 = vpop.f32.mrb[0].mxu0
      %v683 = vpop.f32.mrb[0].mxu0
      %v684 = vadd.f32 0.0, %v683
      %v685 = vpop.f32.mrb[0].mxu0
      %686 = vdwg.mxu0
      %v687 = vadd.f32 %v622, %v681
      %v688 = vadd.f32 %v623, %v684
      %v689 = vxor.u32 %v687, 2147483648
      %v690 = vxor.u32 %v688, 2147483648
      %v691 = vmul.f32 %v689, 1.442695
      %v692 = vpow.pop %v691
      %v693 = vmul.f32 %v690, 1.442695
      %v694 = vpow.pop %v693
      %v695 = vadd.f32 %v692, 1.0
      %v696 = vadd.f32 %v694, 1.0
      %v697 = vrcp.pop %v695
      %v698 = vmul.f32 1.0, %v697
      %v699 = vrcp.pop %v696
      %v700 = vmul.f32 1.0, %v699
      %703 = vrot.lane.b32.xlu0 %v698, 96
      %v704 = vpop.permute.xlu0 %703
      %705 = vrot.lane.b32.xlu0 %v700, 96
      %v706 = vpop.permute.xlu0 %705
      %v709 = vmul.f32 %v687, %v704
      %v710 = vmul.f32 %v688, %v706
      %v711 = vpack.c.bf16 %v710, %v709
      %v716 = vunpack.c.l.b16 %v154
      %v717 = vunpack.c.l.b16 %v155
      %v718 = vunpack.c.l.b16 %v156
      %v719 = vunpack.c.l.b16 %v157
      %v720 = vpack.c.b16 %v717, %v716
      %v721 = vpack.c.b16 %v719, %v718
      %v725 = vsel %vm82, %v711, 0
      %727 = vmatprep.subr.bf16.mxu0 0
      %728 = vmatpush1.bf16.msra.mxu0 %v720
      %729 = vmatprep.subr.bf16.mxu0 0
      %730 = vmatpush1.bf16.msra.mxu0 %v721
      %731 = vmatprep.subr.bf16.mxu0 0
      %732 = vmatpush1.bf16.msra.mxu0 0
      %733 = vmatprep.subr.bf16.mxu0 0
      %734 = vmatpush1.bf16.msra.mxu0 0
      %735 = vmatprep.subr.bf16.mxu0 0
      %736 = vmatpush1.bf16.msra.mxu0 0
      %737 = vmatprep.subr.bf16.mxu0 0
      %738 = vmatpush1.bf16.msra.mxu0 0
      %739 = vmatprep.subr.bf16.mxu0 0
      %740 = vmatpush1.bf16.msra.mxu0 0
      %741 = vmatprep.subr.bf16.mxu0 0
      %742 = vmatpush1.bf16.msra.mxu0 0
      %743 = vmatprep.subr.bf16.mxu0 0
      %744 = vmatpush1.bf16.msra.mxu0 0
      %745 = vmatprep.subr.bf16.mxu0 0
      %746 = vmatpush1.bf16.msra.mxu0 0
      %747 = vmatprep.subr.bf16.mxu0 0
      %748 = vmatpush1.bf16.msra.mxu0 0
      %749 = vmatprep.subr.bf16.mxu0 0
      %750 = vmatpush1.bf16.msra.mxu0 0
      %751 = vmatprep.subr.bf16.mxu0 0
      %752 = vmatpush1.bf16.msra.mxu0 0
      %753 = vmatprep.subr.bf16.mxu0 0
      %754 = vmatpush1.bf16.msra.mxu0 0
      %755 = vmatprep.subr.bf16.mxu0 0
      %756 = vmatpush1.bf16.msra.mxu0 0
      %757 = vmatprep.subr.bf16.mxu0 0
      %758 = vmatpush1.bf16.msra.mxu0 0
      %759 = vmatprep.mubr.bf16.mxu0 0
      %760 = vmatmul.mubr.bf16.gmra.mrb[0].mxu0 %v725
      %v761 = vpop.f32.mrb[0].mxu0
      %v762 = vadd.f32 %v167, %v761
      %v763 = vpop.f32.mrb[0].mxu0
      %v764 = vpop.f32.mrb[0].mxu0
      %v765 = vadd.f32 %v167, %v764
      %v766 = vpop.f32.mrb[0].mxu0
      %767 = vdwg.mxu0
      %v768 = vpack.c.bf16 %v765, %v762
      %v770 = vunpack.c.l.b16 %v768
      %v771 = vunpack.c.h.b16 %v768
      %v772 = vpack.c.b16 %v770, %v770
      %v773 = vpack.c.b16 %v771, %v771
      %v778 = vunpack.c.l.b16 %v208
      %v779 = vunpack.c.l.b16 %v209
      %v780 = vunpack.c.l.b16 %v210
      %v781 = vunpack.c.l.b16 %v211
      %v782 = vpack.c.b16 %v779, %v778
      %v783 = vpack.c.b16 %v781, %v780
      %v787 = vsel %vm82, %v772, 0
      %789 = vmatprep.subr.bf16.mxu0 0
      %790 = vmatpush1.bf16.msra.mxu0 %v782
      %791 = vmatprep.subr.bf16.mxu0 0
      %792 = vmatpush1.bf16.msra.mxu0 %v783
      %793 = vmatprep.subr.bf16.mxu0 0
      %794 = vmatpush1.bf16.msra.mxu0 0
      %795 = vmatprep.subr.bf16.mxu0 0
      %796 = vmatpush1.bf16.msra.mxu0 0
      %797 = vmatprep.subr.bf16.mxu0 0
      %798 = vmatpush1.bf16.msra.mxu0 0
      %799 = vmatprep.subr.bf16.mxu0 0
      %800 = vmatpush1.bf16.msra.mxu0 0
      %801 = vmatprep.subr.bf16.mxu0 0
      %802 = vmatpush1.bf16.msra.mxu0 0
      %803 = vmatprep.subr.bf16.mxu0 0
      %804 = vmatpush1.bf16.msra.mxu0 0
      %805 = vmatprep.subr.bf16.mxu0 0
      %806 = vmatpush1.bf16.msra.mxu0 0
      %807 = vmatprep.subr.bf16.mxu0 0
      %808 = vmatpush1.bf16.msra.mxu0 0
      %809 = vmatprep.subr.bf16.mxu0 0
      %810 = vmatpush1.bf16.msra.mxu0 0
      %811 = vmatprep.subr.bf16.mxu0 0
      %812 = vmatpush1.bf16.msra.mxu0 0
      %813 = vmatprep.subr.bf16.mxu0 0
      %814 = vmatpush1.bf16.msra.mxu0 0
      %815 = vmatprep.subr.bf16.mxu0 0
      %816 = vmatpush1.bf16.msra.mxu0 0
      %817 = vmatprep.subr.bf16.mxu0 0
      %818 = vmatpush1.bf16.msra.mxu0 0
      %819 = vmatprep.subr.bf16.mxu0 0
      %820 = vmatpush1.bf16.msra.mxu0 0
      %821 = vmatprep.mubr.bf16.mxu0 0
      %822 = vmatmul.mubr.bf16.gmra.mrb[0].mxu0 %v787
      %v823 = vpop.f32.mrb[0].mxu0
      %v824 = vadd.f32 %v219, %v823
      %v825 = vpop.f32.mrb[0].mxu0
      %v826 = vpop.f32.mrb[0].mxu0
      %v827 = vpop.f32.mrb[0].mxu0
      %828 = vdwg.mxu0
      %v833 = vunpack.c.l.b16 %v212
      %v834 = vunpack.c.l.b16 %v213
      %v835 = vunpack.c.l.b16 %v214
      %v836 = vunpack.c.l.b16 %v215
      %v837 = vpack.c.b16 %v834, %v833
      %v838 = vpack.c.b16 %v836, %v835
      %v842 = vsel %vm82, %v773, 0
      %844 = vmatprep.subr.bf16.mxu0 0
      %845 = vmatpush1.bf16.msra.mxu0 %v837
      %846 = vmatprep.subr.bf16.mxu0 0
      %847 = vmatpush1.bf16.msra.mxu0 %v838
      %848 = vmatprep.subr.bf16.mxu0 0
      %849 = vmatpush1.bf16.msra.mxu0 0
      %850 = vmatprep.subr.bf16.mxu0 0
      %851 = vmatpush1.bf16.msra.mxu0 0
      %852 = vmatprep.subr.bf16.mxu0 0
      %853 = vmatpush1.bf16.msra.mxu0 0
      %854 = vmatprep.subr.bf16.mxu0 0
      %855 = vmatpush1.bf16.msra.mxu0 0
      %856 = vmatprep.subr.bf16.mxu0 0
      %857 = vmatpush1.bf16.msra.mxu0 0
      %858 = vmatprep.subr.bf16.mxu0 0
      %859 = vmatpush1.bf16.msra.mxu0 0
      %860 = vmatprep.subr.bf16.mxu0 0
      %861 = vmatpush1.bf16.msra.mxu0 0
      %862 = vmatprep.subr.bf16.mxu0 0
      %863 = vmatpush1.bf16.msra.mxu0 0
      %864 = vmatprep.subr.bf16.mxu0 0
      %865 = vmatpush1.bf16.msra.mxu0 0
      %866 = vmatprep.subr.bf16.mxu0 0
      %867 = vmatpush1.bf16.msra.mxu0 0
      %868 = vmatprep.subr.bf16.mxu0 0
      %869 = vmatpush1.bf16.msra.mxu0 0
      %870 = vmatprep.subr.bf16.mxu0 0
      %871 = vmatpush1.bf16.msra.mxu0 0
      %872 = vmatprep.subr.bf16.mxu0 0
      %873 = vmatpush1.bf16.msra.mxu0 0
      %874 = vmatprep.subr.bf16.mxu0 0
      %875 = vmatpush1.bf16.msra.mxu0 0
      %876 = vmatprep.mubr.bf16.mxu0 0
      %877 = vmatmul.mubr.bf16.gmra.mrb[0].mxu0 %v842
      %v878 = vpop.f32.mrb[0].mxu0
      %v879 = vadd.f32 %v219, %v878
      %v880 = vpop.f32.mrb[0].mxu0
      %v881 = vpop.f32.mrb[0].mxu0
      %v882 = vpop.f32.mrb[0].mxu0
      %883 = vdwg.mxu0
      %884 = vmax.xlane.f32.xlu0 %v824
      %v885 = vpop.xlane.xlu0 %884
      %886 = vmax.xlane.f32.xlu0 %v879
      %v887 = vpop.xlane.xlu0 %886
      %v888 = vsub.f32 %v824, %v885
      %v889 = vsub.f32 %v879, %v887
      %v890 = vmul.f32 %v888, 1.442695
      %v891 = vpow.pop %v890
      %v892 = vmul.f32 %v889, 1.442695
      %v893 = vpow.pop %v892
      %894 = vadd.xlane.f32.xlu0 %v891
      %v895 = vpop.xlane.xlu0 %894
      %896 = vadd.xlane.f32.xlu0 %v893
      %v897 = vpop.xlane.xlu0 %896
      %v898 = vrcp.pop %v895
      %v899 = vmul.f32 %v891, %v898
      %v900 = vrcp.pop %v897
      %v901 = vmul.f32 %v893, %v900
      %v902 = vpack.c.bf16 %v899, %v899
      %v903 = vpack.c.bf16 %v901, %v901
      %v920 = vunpack.c.l.b16 %v176
      %v921 = vunpack.c.l.b16 %v177
      %v922 = vunpack.c.l.b16 %v178
      %v923 = vunpack.c.l.b16 %v179
      %v924 = vunpack.c.l.b16 %v180
      %v925 = vunpack.c.l.b16 %v181
      %v926 = vunpack.c.l.b16 %v182
      %v927 = vunpack.c.l.b16 %v183
      %v928 = vunpack.c.l.b16 %v184
      %v929 = vunpack.c.l.b16 %v185
      %v930 = vunpack.c.l.b16 %v186
      %v931 = vunpack.c.l.b16 %v187
      %v932 = vunpack.c.l.b16 %v188
      %v933 = vunpack.c.l.b16 %v189
      %v934 = vunpack.c.l.b16 %v190
      %v935 = vunpack.c.l.b16 %v191
      %v936 = vpack.c.b16 %v921, %v920
      %v937 = vpack.c.b16 %v923, %v922
      %v938 = vpack.c.b16 %v925, %v924
      %v939 = vpack.c.b16 %v927, %v926
      %v940 = vpack.c.b16 %v929, %v928
      %v941 = vpack.c.b16 %v931, %v930
      %v942 = vpack.c.b16 %v933, %v932
      %v943 = vpack.c.b16 %v935, %v934
      %952 = vmatprep.subr.bf16.mxu0 0
      %953 = vmatpush1.bf16.msra.mxu0 %v936
      %954 = vmatprep.subr.bf16.mxu0 0
      %955 = vmatpush1.bf16.msra.mxu0 %v937
      %956 = vmatprep.subr.bf16.mxu0 0
      %957 = vmatpush1.bf16.msra.mxu0 %v938
      %958 = vmatprep.subr.bf16.mxu0 0
      %959 = vmatpush1.bf16.msra.mxu0 %v939
      %960 = vmatprep.subr.bf16.mxu0 0
      %961 = vmatpush1.bf16.msra.mxu0 %v940
      %962 = vmatprep.subr.bf16.mxu0 0
      %963 = vmatpush1.bf16.msra.mxu0 %v941
      %964 = vmatprep.subr.bf16.mxu0 0
      %965 = vmatpush1.bf16.msra.mxu0 %v942
      %966 = vmatprep.subr.bf16.mxu0 0
      %967 = vmatpush1.bf16.msra.mxu0 %v943
      %968 = vmatprep.subr.bf16.mxu0 0
      %969 = vmatpush1.bf16.msra.mxu0 0
      %970 = vmatprep.subr.bf16.mxu0 0
      %971 = vmatpush1.bf16.msra.mxu0 0
      %972 = vmatprep.subr.bf16.mxu0 0
      %973 = vmatpush1.bf16.msra.mxu0 0
      %974 = vmatprep.subr.bf16.mxu0 0
      %975 = vmatpush1.bf16.msra.mxu0 0
      %976 = vmatprep.subr.bf16.mxu0 0
      %977 = vmatpush1.bf16.msra.mxu0 0
      %978 = vmatprep.subr.bf16.mxu0 0
      %979 = vmatpush1.bf16.msra.mxu0 0
      %980 = vmatprep.subr.bf16.mxu0 0
      %981 = vmatpush1.bf16.msra.mxu0 0
      %982 = vmatprep.subr.bf16.mxu0 0
      %983 = vmatpush1.bf16.msra.mxu0 0
      %984 = vmatprep.mubr.bf16.mxu0 0
      %985 = vmatmul.mubr.bf16.gmra.mrb[0].mxu0 %v902
      %v986 = vpop.f32.mrb[0].mxu0
      %v987 = vadd.f32 0.0, %v986
      %v988 = vpop.f32.mrb[0].mxu0
      %v989 = vpop.f32.mrb[0].mxu0
      %v990 = vpop.f32.mrb[0].mxu0
      %991 = vdwg.mxu0
      %v1008 = vunpack.c.l.b16 %v192
      %v1009 = vunpack.c.l.b16 %v193
      %v1010 = vunpack.c.l.b16 %v194
      %v1011 = vunpack.c.l.b16 %v195
      %v1012 = vunpack.c.l.b16 %v196
      %v1013 = vunpack.c.l.b16 %v197
      %v1014 = vunpack.c.l.b16 %v198
      %v1015 = vunpack.c.l.b16 %v199
      %v1016 = vunpack.c.l.b16 %v200
      %v1017 = vunpack.c.l.b16 %v201
      %v1018 = vunpack.c.l.b16 %v202
      %v1019 = vunpack.c.l.b16 %v203
      %v1020 = vunpack.c.l.b16 %v204
      %v1021 = vunpack.c.l.b16 %v205
      %v1022 = vunpack.c.l.b16 %v206
      %v1023 = vunpack.c.l.b16 %v207
      %v1024 = vpack.c.b16 %v1009, %v1008
      %v1025 = vpack.c.b16 %v1011, %v1010
      %v1026 = vpack.c.b16 %v1013, %v1012
      %v1027 = vpack.c.b16 %v1015, %v1014
      %v1028 = vpack.c.b16 %v1017, %v1016
      %v1029 = vpack.c.b16 %v1019, %v1018
      %v1030 = vpack.c.b16 %v1021, %v1020
      %v1031 = vpack.c.b16 %v1023, %v1022
      %1040 = vmatprep.subr.bf16.mxu0 0
      %1041 = vmatpush1.bf16.msra.mxu0 %v1024
      %1042 = vmatprep.subr.bf16.mxu0 0
      %1043 = vmatpush1.bf16.msra.mxu0 %v1025
      %1044 = vmatprep.subr.bf16.mxu0 0
      %1045 = vmatpush1.bf16.msra.mxu0 %v1026
      %1046 = vmatprep.subr.bf16.mxu0 0
      %1047 = vmatpush1.bf16.msra.mxu0 %v1027
      %1048 = vmatprep.subr.bf16.mxu0 0
      %1049 = vmatpush1.bf16.msra.mxu0 %v1028
      %1050 = vmatprep.subr.bf16.mxu0 0
      %1051 = vmatpush1.bf16.msra.mxu0 %v1029
      %1052 = vmatprep.subr.bf16.mxu0 0
      %1053 = vmatpush1.bf16.msra.mxu0 %v1030
      %1054 = vmatprep.subr.bf16.mxu0 0
      %1055 = vmatpush1.bf16.msra.mxu0 %v1031
      %1056 = vmatprep.subr.bf16.mxu0 0
      %1057 = vmatpush1.bf16.msra.mxu0 0
      %1058 = vmatprep.subr.bf16.mxu0 0
      %1059 = vmatpush1.bf16.msra.mxu0 0
      %1060 = vmatprep.subr.bf16.mxu0 0
      %1061 = vmatpush1.bf16.msra.mxu0 0
      %1062 = vmatprep.subr.bf16.mxu0 0
      %1063 = vmatpush1.bf16.msra.mxu0 0
      %1064 = vmatprep.subr.bf16.mxu0 0
      %1065 = vmatpush1.bf16.msra.mxu0 0
      %1066 = vmatprep.subr.bf16.mxu0 0
      %1067 = vmatpush1.bf16.msra.mxu0 0
      %1068 = vmatprep.subr.bf16.mxu0 0
      %1069 = vmatpush1.bf16.msra.mxu0 0
      %1070 = vmatprep.subr.bf16.mxu0 0
      %1071 = vmatpush1.bf16.msra.mxu0 0
      %1072 = vmatprep.mubr.bf16.mxu0 0
      %1073 = vmatmul.mubr.bf16.gmra.mrb[0].mxu0 %v903
      %v1074 = vpop.f32.mrb[0].mxu0
      %v1075 = vadd.f32 0.0, %v1074
      %v1076 = vpop.f32.mrb[0].mxu0
      %v1077 = vpop.f32.mrb[0].mxu0
      %v1078 = vpop.f32.mrb[0].mxu0
      %1079 = vdwg.mxu0
      %v1080 = vmul.f32 %v987, 8.0
      %v1081 = vmul.f32 %v1075, 8.0
      %v1082 = vpack.c.bf16 %v1081, %v1080
      %v1087 = vunpack.c.l.b16 %v158
      %v1088 = vunpack.c.l.b16 %v159
      %v1089 = vunpack.c.l.b16 %v160
      %v1090 = vunpack.c.l.b16 %v161
      %v1091 = vpack.c.b16 %v1088, %v1087
      %v1092 = vpack.c.b16 %v1090, %v1089
      %v1096 = vsel %vm82, %v1082, 0
      %1098 = vmatprep.subr.bf16.mxu0 0
      %1099 = vmatpush1.bf16.msra.mxu0 %v1091
      %1100 = vmatprep.subr.bf16.mxu0 0
      %1101 = vmatpush1.bf16.msra.mxu0 %v1092
      %1102 = vmatprep.subr.bf16.mxu0 0
      %1103 = vmatpush1.bf16.msra.mxu0 0
      %1104 = vmatprep.subr.bf16.mxu0 0
      %1105 = vmatpush1.bf16.msra.mxu0 0
      %1106 = vmatprep.subr.bf16.mxu0 0
      %1107 = vmatpush1.bf16.msra.mxu0 0
      %1108 = vmatprep.subr.bf16.mxu0 0
      %1109 = vmatpush1.bf16.msra.mxu0 0
      %1110 = vmatprep.subr.bf16.mxu0 0
      %1111 = vmatpush1.bf16.msra.mxu0 0
      %1112 = vmatprep.subr.bf16.mxu0 0
      %1113 = vmatpush1.bf16.msra.mxu0 0
      %1114 = vmatprep.subr.bf16.mxu0 0
      %1115 = vmatpush1.bf16.msra.mxu0 0
      %1116 = vmatprep.subr.bf16.mxu0 0
      %1117 = vmatpush1.bf16.msra.mxu0 0
      %1118 = vmatprep.subr.bf16.mxu0 0
      %1119 = vmatpush1.bf16.msra.mxu0 0
      %1120 = vmatprep.subr.bf16.mxu0 0
      %1121 = vmatpush1.bf16.msra.mxu0 0
      %1122 = vmatprep.subr.bf16.mxu0 0
      %1123 = vmatpush1.bf16.msra.mxu0 0
      %1124 = vmatprep.subr.bf16.mxu0 0
      %1125 = vmatpush1.bf16.msra.mxu0 0
      %1126 = vmatprep.subr.bf16.mxu0 0
      %1127 = vmatpush1.bf16.msra.mxu0 0
      %1128 = vmatprep.subr.bf16.mxu0 0
      %1129 = vmatpush1.bf16.msra.mxu0 0
      %1130 = vmatprep.mubr.bf16.mxu0 0
      %1131 = vmatmul.mubr.bf16.gmra.mrb[0].mxu0 %v1096
      %v1132 = vpop.f32.mrb[0].mxu0
      %v1133 = vadd.f32 %v174, %v1132
      %v1134 = vpop.f32.mrb[0].mxu0
      %v1135 = vpop.f32.mrb[0].mxu0
      %v1136 = vadd.f32 %v174, %v1135
      %v1137 = vpop.f32.mrb[0].mxu0
      %1138 = vdwg.mxu0
      %v1139 = vadd.f32 %v1133, %v709
      %v1140 = vadd.f32 %v1136, %v710
      %v1141 = vmul.f32 %v1139, 0.70710677
      %v1142 = vmul.f32 %v1140, 0.70710677
    $region66: #{tpu_custom_call.1} parent=1 // loop_footer
      %s228 = sadd.s32 1, %s224
    $region67: #{tpu_custom_call.1} parent=1 // loop_footer_branch
      %223 = sbr.rel target = $region63
    $region68: #{tpu_custom_call.1} parent=1 // loop_exit
      _
    %v1143 = vadd.f32 %v229, %v121
    %v1144 = vadd.f32 %v230, %v124
    %v1145 = vmul.f32 %v1143, 0.70710677
    %v1146 = vmul.f32 %v1144, 0.70710677
    %v1147 = vpack.c.bf16 %v1146, %v1145
    %v1148 = vld [vmem:[%s11] sm:$0xf]
    %v1149 = vld [vmem:[%s11 + $0x4] sm:$0xf]
    %v1150 = vld [vmem:[%s11 + $0x8] sm:$0xf]
    %v1151 = vld [vmem:[%s11 + $0xc] sm:$0xf]
    %v1152 = vld [vmem:[%s12] sm:$0x1]
    %v1154 = vlaneseq
    %v1155 = vshrl.u32 %v1154, 7
    %v1156 = vsub.s32 0, %v1155
    %v1157 = vrot.slane %v1152, %v1156
    %v1163 = vunpack.c.l.b16 %v1148
    %v1164 = vunpack.c.l.b16 %v1149
    %v1165 = vunpack.c.l.b16 %v1150
    %v1166 = vunpack.c.l.b16 %v1151
    %v1167 = vpack.c.b16 %v1164, %v1163
    %v1168 = vpack.c.b16 %v1166, %v1165
    %v1172 = vsel %vm82, %v1147, 0
    %1174 = vmatprep.subr.bf16.mxu0 0
    %1175 = vmatpush1.bf16.msra.mxu0 %v1167
    %1176 = vmatprep.subr.bf16.mxu0 0
    %1177 = vmatpush1.bf16.msra.mxu0 %v1168
    %1178 = vmatprep.subr.bf16.mxu0 0
    %1179 = vmatpush1.bf16.msra.mxu0 0
    %1180 = vmatprep.subr.bf16.mxu0 0
    %1181 = vmatpush1.bf16.msra.mxu0 0
    %1182 = vmatprep.subr.bf16.mxu0 0
    %1183 = vmatpush1.bf16.msra.mxu0 0
    %1184 = vmatprep.subr.bf16.mxu0 0
    %1185 = vmatpush1.bf16.msra.mxu0 0
    %1186 = vmatprep.subr.bf16.mxu0 0
    %1187 = vmatpush1.bf16.msra.mxu0 0
    %1188 = vmatprep.subr.bf16.mxu0 0
    %1189 = vmatpush1.bf16.msra.mxu0 0
    %1190 = vmatprep.subr.bf16.mxu0 0
    %1191 = vmatpush1.bf16.msra.mxu0 0
    %1192 = vmatprep.subr.bf16.mxu0 0
    %1193 = vmatpush1.bf16.msra.mxu0 0
    %1194 = vmatprep.subr.bf16.mxu0 0
    %1195 = vmatpush1.bf16.msra.mxu0 0
    %1196 = vmatprep.subr.bf16.mxu0 0
    %1197 = vmatpush1.bf16.msra.mxu0 0
    %1198 = vmatprep.subr.bf16.mxu0 0
    %1199 = vmatpush1.bf16.msra.mxu0 0
    %1200 = vmatprep.subr.bf16.mxu0 0
    %1201 = vmatpush1.bf16.msra.mxu0 0
    %1202 = vmatprep.subr.bf16.mxu0 0
    %1203 = vmatpush1.bf16.msra.mxu0 0
    %1204 = vmatprep.subr.bf16.mxu0 0
    %1205 = vmatpush1.bf16.msra.mxu0 0
    %1206 = vmatprep.mubr.bf16.mxu0 0
    %1207 = vmatmul.mubr.bf16.gmra.mrb[0].mxu0 %v1172
    %v1208 = vpop.f32.mrb[0].mxu0
    %v1209 = vadd.f32 %v1157, %v1208
    %v1210 = vpop.f32.mrb[0].mxu0
    %v1211 = vpop.f32.mrb[0].mxu0
    %v1212 = vadd.f32 %v1157, %v1211
    %v1213 = vpop.f32.mrb[0].mxu0
    %1214 = vdwg.mxu0
    %v1215 = vpack.c.bf16 %v1212, %v1209
    %v1216 = vld [vmem:[%s13] sm:$0xf]
    %v1217 = vld [vmem:[%s13 + $0x4] sm:$0xf]
    %v1218 = vld [vmem:[%s13 + $0x8] sm:$0xf]
    %v1219 = vld [vmem:[%s13 + $0xc] sm:$0xf]
    %v1220 = vld [vmem:[%s14] sm:$0x1]
    %v1222 = vlaneseq
    %v1223 = vshrl.u32 %v1222, 7
    %v1224 = vsub.s32 0, %v1223
    %v1225 = vrot.slane %v1220, %v1224
    %v1231 = vunpack.c.l.b16 %v1216
    %v1232 = vunpack.c.l.b16 %v1217
    %v1233 = vunpack.c.l.b16 %v1218
    %v1234 = vunpack.c.l.b16 %v1219
    %v1235 = vpack.c.b16 %v1232, %v1231
    %v1236 = vpack.c.b16 %v1234, %v1233
    %v1240 = vsel %vm82, %v1215, 0
    %1242 = vmatprep.subr.bf16.mxu0 0
    %1243 = vmatpush1.bf16.msra.mxu0 %v1235
    %1244 = vmatprep.subr.bf16.mxu0 0
    %1245 = vmatpush1.bf16.msra.mxu0 %v1236
    %1246 = vmatprep.subr.bf16.mxu0 0
    %1247 = vmatpush1.bf16.msra.mxu0 0
    %1248 = vmatprep.subr.bf16.mxu0 0
    %1249 = vmatpush1.bf16.msra.mxu0 0
    %1250 = vmatprep.subr.bf16.mxu0 0
    %1251 = vmatpush1.bf16.msra.mxu0 0
    %1252 = vmatprep.subr.bf16.mxu0 0
    %1253 = vmatpush1.bf16.msra.mxu0 0
    %1254 = vmatprep.subr.bf16.mxu0 0
    %1255 = vmatpush1.bf16.msra.mxu0 0
    %1256 = vmatprep.subr.bf16.mxu0 0
    %1257 = vmatpush1.bf16.msra.mxu0 0
    %1258 = vmatprep.subr.bf16.mxu0 0
    %1259 = vmatpush1.bf16.msra.mxu0 0
    %1260 = vmatprep.subr.bf16.mxu0 0
    %1261 = vmatpush1.bf16.msra.mxu0 0
    %1262 = vmatprep.subr.bf16.mxu0 0
    %1263 = vmatpush1.bf16.msra.mxu0 0
    %1264 = vmatprep.subr.bf16.mxu0 0
    %1265 = vmatpush1.bf16.msra.mxu0 0
    %1266 = vmatprep.subr.bf16.mxu0 0
    %1267 = vmatpush1.bf16.msra.mxu0 0
    %1268 = vmatprep.subr.bf16.mxu0 0
    %1269 = vmatpush1.bf16.msra.mxu0 0
    %1270 = vmatprep.subr.bf16.mxu0 0
    %1271 = vmatpush1.bf16.msra.mxu0 0
    %1272 = vmatprep.subr.bf16.mxu0 0
    %1273 = vmatpush1.bf16.msra.mxu0 0
    %1274 = vmatprep.mubr.bf16.mxu0 0
    %1275 = vmatmul.mubr.bf16.gmra.mrb[0].mxu0 %v1240
    %v1276 = vpop.f32.mrb[0].mxu0
    %v1277 = vadd.f32 %v1225, %v1276
    %v1278 = vpop.f32.mrb[0].mxu0
    %v1279 = vpop.f32.mrb[0].mxu0
    %v1280 = vadd.f32 %v1225, %v1279
    %v1281 = vpop.f32.mrb[0].mxu0
    %1282 = vdwg.mxu0
    %1283 = vmax.xlane.f32.xlu0 %v1277
    %v1284 = vpop.xlane.xlu0 %1283
    %1285 = vmax.xlane.f32.xlu0 %v1280
    %v1286 = vpop.xlane.xlu0 %1285
    %v1287 = vsub.f32 %v1277, %v1284
    %v1288 = vsub.f32 %v1280, %v1286
    %v1289 = vmul.f32 %v1287, 1.442695
    %v1290 = vpow.pop %v1289
    %v1291 = vmul.f32 %v1288, 1.442695
    %v1292 = vpow.pop %v1291
    %1293 = vadd.xlane.f32.xlu0 %v1290
    %v1294 = vpop.xlane.xlu0 %1293
    %1295 = vadd.xlane.f32.xlu0 %v1292
    %v1296 = vpop.xlane.xlu0 %1295
    %v1297 = vlog2.pop %v1294
    %v1298 = vmul.f32 %v1297, 0.6931472
    %v1299 = vlog2.pop %v1296
    %v1300 = vmul.f32 %v1299, 0.6931472
    %v1301 = vsub.f32 %v1287, %v1298
    %v1302 = vsub.f32 %v1288, %v1300
    %1303 = vst [vmem:[#allocation3] sm:$0xff] %v1301
    %1304 = vst [vmem:[#allocation3 + $0x8] sm:$0xff] %v1302
    // Predicated region
    $region69: #{tpu_custom_call.1} parent=1 // pred_check
      _
    $region70: #{tpu_custom_call.1} parent=1 // pred_check_branch
      %1306 = sbr.rel (0) target = $region72
    $region71: #{tpu_custom_call.1} parent=1 // pred_region
      %s1308 = ssub.s32 256, 256
      %1309 = vsyncadd [#allocation4], %s1308
      %s1310 = sshll.u32 [#allocation3], 4
      %s1311 = int_to_ptr.vmem [resolvable:$true] %s1310
      %1316 = dma.vmem_to_hbm [thread:$0]  %s1311, 256, %s15, [#allocation4], 128, 128, 8
    $region72: #{tpu_custom_call.1} parent=1 // pred_fallthru
      _
    // Predicated region
    $region73: #{tpu_custom_call.1} parent=1 // pred_check
      _
    $region74: #{tpu_custom_call.1} parent=1 // pred_check_branch
      %1318 = sbr.rel (0) target = $region76
    $region75: #{tpu_custom_call.1} parent=1 // pred_region
      %1319 = dma.done [#allocation4], 256
    $region76: #{tpu_custom_call.1} parent=1 // pred_fallthru
      _
    %1320 = vsyncpa [#allocation4], 1

</llo_original>
